<compile_context>
chip_gen: v6e
topology: v6e:2x2x1
jax: 0.10.0
libtpu: 0.0.40
codegen_flags: <defaults>
</compile_context>

<pallas_src>
import math
import numpy as np
import jax
import jax.numpy as jnp
from jax.experimental import pallas as pl
from jax.experimental.pallas import tpu as pltpu

# ---- small, shape-consistent configuration (stands in for Llama params) ----
B = 2            # batch
S = 8            # seq_len (prefill)
D = 128          # hidden dim
H = 4            # n_heads
KVH = 2          # n_kv_heads (GQA)
HD = D // H      # head_dim = 32
FF = 256         # FFN hidden dim
EPS = 1e-5       # RMSNorm eps
ROPE_THETA = 10000.0
MAX_SEQ_LEN = 32
HALF = HD // 2
N_REP = H // KVH
SCALE = 1.0 / math.sqrt(HD)

BS = B * S
QW = H * HD          # 128
KW = KVH * HD        # 64
NEG_INF = -1e30      # finite large-negative (avoids NaN on fully-masked rows)
MXU_DTYPE = jnp.bfloat16   # bf16 operands, f32 accumulation


def _rmsnorm(x, w):
    # x: (S, D), w: (1, D)
    var = jnp.mean(x * x, axis=-1, keepdims=True)
    return x * jax.lax.rsqrt(var + EPS) * w


def decoder_kernel(x_ref, wqkv_ref, wo_ref, w13_ref, w2_ref,
                   attn_nw_ref, ffn_nw_ref, cos_ref, sin_ref,
                   o_ref, attn_sc):
    f32 = jnp.float32
    x = x_ref[...]                          # (S, D) f32, one batch element

    # ----- causal mask for this batch element (rows are positions 0..S-1) ---
    row = jax.lax.broadcasted_iota(jnp.int32, (S, S), 0)
    col = jax.lax.broadcasted_iota(jnp.int32, (S, S), 1)
    allowed = col <= row

    # ----- RoPE tables broadcast across heads in-kernel (cheap lane concat) --
    cos_q = jnp.concatenate([cos_ref[...]] * H, axis=-1)    # (S, QW)
    sin_q = jnp.concatenate([sin_ref[...]] * H, axis=-1)    # (S, QW)

    # ------------------------------ attention -------------------------------
    xn = _rmsnorm(x, attn_nw_ref[...])
    qkv = jnp.dot(xn.astype(MXU_DTYPE), wqkv_ref[...],
                  preferred_element_type=f32)                # (S, 2*QW + 3*KW)
    q = qkv[:, 0:QW]
    qh = qkv[:, QW:2 * QW]                                   # x @ (Wq @ R)
    k = qkv[:, 2 * QW:2 * QW + KW]
    kh = qkv[:, 2 * QW + KW:2 * QW + 2 * KW]                 # x @ (Wk @ R)
    v = qkv[:, 2 * QW + 2 * KW:2 * QW + 3 * KW]

    # RoPE, vectorized over all heads (interleaved complex-pair layout).
    # Softmax SCALE is already folded into the Q projection weights.
    q_rot = q * cos_q + qh * sin_q                           # (S, H*HD)
    k_rot = k * cos_q[:, :KW] + kh * sin_q[:, :KW]           # (S, KVH*HD)

    dn = (((1,), (1,)), ((), ()))      # contract last dim of both operands
    # H is small; a static unrolled loop is fine at this size.
    # TODO(synk): at real H use lax.fori_loop(unroll=True) + flash-style tiles.
    for h in range(H):
        j = h // N_REP
        q_h = q_rot[:, h * HD:(h + 1) * HD]                  # (S, HD)
        k_h = k_rot[:, j * HD:(j + 1) * HD]
        v_h = v[:, j * HD:(j + 1) * HD]
        s = jax.lax.dot_general(q_h.astype(MXU_DTYPE), k_h.astype(MXU_DTYPE),
                                dn, preferred_element_type=f32)   # (S, S)
        s = jnp.where(allowed, s, jnp.float32(NEG_INF))
        m = jnp.max(s, axis=-1, keepdims=True)
        e = jnp.exp(s - m)
        inv = pl.reciprocal(jnp.sum(e, axis=-1, keepdims=True), approx=True)
        p = (e * inv).astype(MXU_DTYPE)
        # write head output straight into its lane slice of the VMEM scratch
        attn_sc[:, h * HD:(h + 1) * HD] = jnp.dot(
            p, v_h.astype(MXU_DTYPE), preferred_element_type=f32)

    h1 = x + jnp.dot(attn_sc[...].astype(MXU_DTYPE), wo_ref[...],
                     preferred_element_type=f32)

    # -------------------------- feed forward (SwiGLU) ------------------------
    hn = _rmsnorm(h1, ffn_nw_ref[...])
    gu = jnp.dot(hn.astype(MXU_DTYPE), w13_ref[...],
                 preferred_element_type=f32)                 # (S, 2*FF)
    g = gu[:, :FF]
    u = gu[:, FF:]
    ff = (g * jax.nn.sigmoid(g)) * u
    out = h1 + jnp.dot(ff.astype(MXU_DTYPE), w2_ref[...],
                       preferred_element_type=f32)

    o_ref[...] = out.astype(o_ref.dtype)


# ------------- one-time (hoisted) weight / table preprocessing --------------
def prepare_decoder_params(params, cos, sin):
    """Done ONCE per layer, outside the per-forward path."""
    f32 = jnp.float32

    def rot_half_cols(w, n_heads):
        # Exact columns of (w @ R): R is the signed interleaved rotate-half
        # permutation, so this is a column permute + negation (no fp error).
        w4 = w.reshape(D, n_heads, HALF, 2)
        return jnp.stack([-w4[..., 1], w4[..., 0]], axis=-1
                         ).reshape(D, n_heads * HD)

    wq = params['wq'] * SCALE          # fold softmax 1/sqrt(HD) into Wq
    wk = params['wk']
    wqkv = jnp.concatenate(
        [wq, rot_half_cols(wq, H), wk, rot_half_cols(wk, KVH), params['wv']],
        axis=1).astype(MXU_DTYPE)                                 # (D, 448)
    w13 = jnp.concatenate([params['w1'], params['w3']],
                          axis=1).astype(MXU_DTYPE)               # (D, 2*FF)
    wo = params['wo'].astype(MXU_DTYPE)                           # (H*HD, D)
    w2 = params['w2'].astype(MXU_DTYPE)                           # (FF, D)
    attn_nw = params['attn_norm'].reshape(1, D).astype(f32)
    ffn_nw = params['ffn_norm'].reshape(1, D).astype(f32)

    # RoPE tables: duplicate each frequency across its (even, odd) pair; the
    # head/batch broadcast happens in-kernel.  Shapes stay (S, HD).
    cos2 = jnp.repeat(cos, 2, axis=-1).astype(f32)                # (S, HD)
    sin2 = jnp.repeat(sin, 2, axis=-1).astype(f32)
    return (wqkv, wo, w13, w2, attn_nw, ffn_nw, cos2, sin2)


def llama_decoder_pallas(x, prepped, mask=None):
    # The block-causal prefill mask is rebuilt in-kernel; the incoming mask
    # (matching prepare_inputs_prefill) is accepted for interface parity.
    # TODO(synk): generic / decode-mode masks not wired through.
    del mask
    wqkv, wo, w13, w2, attn_nw, ffn_nw, cos2, sin2 = prepped
    x2 = x.reshape(BS, D).astype(jnp.float32)

    weight_ins = (wqkv, wo, w13, w2, attn_nw, ffn_nw, cos2, sin2)
    in_specs = [pl.BlockSpec((S, D), lambda b: (b, 0))]
    in_specs += [pl.BlockSpec(a.shape, lambda b, _nd=a.ndim: (0,) * _nd)
                 for a in weight_ins]

    # advisory cost estimate (per review): flops / transcendentals / bytes
    flops = B * (2 * S * D * (2 * QW + 3 * KW)
                 + H * (2 * S * S * HD) * 2
                 + 2 * S * QW * D
                 + 2 * S * D * (2 * FF)
                 + 2 * S * FF * D)
    transc = B * (H * S * S + S * FF)
    bytes_acc = (2 * BS * D * 4
                 + (D * (2 * QW + 3 * KW) + QW * D + D * 2 * FF + FF * D) * 2
                 + 2 * D * 4 + 2 * S * HD * 4)
    ce = pl.CostEstimate(flops=int(flops), transcendentals=int(transc),
                         bytes_accessed=int(bytes_acc))

    grid_spec = pltpu.PrefetchScalarGridSpec(
        num_scalar_prefetch=0,
        grid=(B,),                                # one batch element per step
        in_specs=in_specs,
        out_specs=pl.BlockSpec((S, D), lambda b: (b, 0)),
        scratch_shapes=[pltpu.VMEM((S, QW), jnp.float32)],
    )
    out = pl.pallas_call(
        decoder_kernel,
        out_shape=jax.ShapeDtypeStruct((BS, D), jnp.float32),
        grid_spec=grid_spec,
        compiler_params=pltpu.CompilerParams(
            dimension_semantics=("parallel",)),   # v7x: batch split across TCs
        cost_estimate=ce,
    )(x2, *weight_ins)
    return out.reshape(B, S, D)


# ---------------- deterministic parameter init ----------------
def make_params(key):
    ks = jax.random.split(key, 9)
    s = 0.02
    return {
        'wq': jax.random.normal(ks[0], (D, H * HD), jnp.float32) * s,
        'wk': jax.random.normal(ks[1], (D, KVH * HD), jnp.float32) * s,
        'wv': jax.random.normal(ks[2], (D, KVH * HD), jnp.float32) * s,
        'wo': jax.random.normal(ks[3], (H * HD, D), jnp.float32) * s,
        'w1': jax.random.normal(ks[4], (D, FF), jnp.float32) * s,
        'w2': jax.random.normal(ks[5], (FF, D), jnp.float32) * s,
        'w3': jax.random.normal(ks[6], (D, FF), jnp.float32) * s,
        'attn_norm': 1.0 + 0.1 * jax.random.normal(ks[7], (D,), jnp.float32),
        'ffn_norm': 1.0 + 0.1 * jax.random.normal(ks[8], (D,), jnp.float32),
    }


def precompute_freqs_cos_sin(head_dim, end, theta):
    freqs = 1.0 / (theta ** (np.arange(0, head_dim, 2)[: head_dim // 2]
                             .astype(np.float32) / head_dim))
    t = np.arange(end, dtype=np.float32)
    ang = np.outer(t, freqs)
    return jnp.asarray(np.cos(ang)), jnp.asarray(np.sin(ang))


# -------- pure-JAX reference (reproduces torch TransformerBlock semantics) ---
def reference_decoder(x, params, cos, sin, mask):
    def rmsnorm(v, w):
        return v * jax.lax.rsqrt(jnp.mean(v * v, axis=-1, keepdims=True) + EPS) * w

    xn = rmsnorm(x, params['attn_norm'])
    q = (xn @ params['wq']).reshape(B, S, H, HD)
    k = (xn @ params['wk']).reshape(B, S, KVH, HD)
    v = (xn @ params['wv']).reshape(B, S, KVH, HD)

    def rope(t):  # interleaved complex-pair RoPE, exactly like apply_rotary_emb
        tr = t.reshape(t.shape[:-1] + (HALF, 2))
        te, to = tr[..., 0], tr[..., 1]
        c = cos[None, :, None, :]
        s = sin[None, :, None, :]
        return jnp.stack([te * c - to * s, te * s + to * c], axis=-1).reshape(t.shape)

    q, k = rope(q), rope(k)
    k = jnp.repeat(k, N_REP, axis=2)   # repeat_kv
    v = jnp.repeat(v, N_REP, axis=2)
    q, k, v = (a.transpose(0, 2, 1, 3) for a in (q, k, v))
    scores = jnp.einsum('bhqd,bhkd->bhqk', q, k) * SCALE + mask
    p = jax.nn.softmax(scores, axis=-1)
    o = jnp.einsum('bhqk,bhkd->bhqd', p, v).transpose(0, 2, 1, 3).reshape(B, S, H * HD)
    h1 = x + o @ params['wo']
    hn = rmsnorm(h1, params['ffn_norm'])
    ff = jax.nn.silu(hn @ params['w1']) * (hn @ params['w3'])
    return h1 + ff @ params['w2']


if __name__ == "__main__":
    key = jax.random.PRNGKey(0)
    kx, kp = jax.random.split(key)
    params = make_params(kp)
    x = jax.random.normal(kx, (B, S, D), jnp.float32)

    start_pos = 0  # prefill
    cos_all, sin_all = precompute_freqs_cos_sin(HD, MAX_SEQ_LEN * 2, ROPE_THETA)
    cos = cos_all[start_pos:start_pos + S]
    sin = sin_all[start_pos:start_pos + S]

    # prepare_inputs_prefill-style mask (used by the reference; the kernel
    # rebuilds the same causal pattern internally).
    causal = jnp.triu(jnp.full((S, S), -jnp.inf, dtype=jnp.float32), k=1)
    mask = jnp.broadcast_to(causal[None, None], (B, H, S, S))

    # one-time (per layer) weight preprocessing, hoisted out of the forward
    prepped = jax.block_until_ready(prepare_decoder_params(params, cos, sin))

    out = llama_decoder_pallas(x, prepped, mask)
    out = jax.block_until_ready(out)

    ref = reference_decoder(x, params, cos, sin, mask)
    assert out.shape == (B, S, D)
    # bf16 MXU operands + approx reciprocal: tolerance loosened per review.
    np.testing.assert_allclose(np.asarray(out), np.asarray(ref),
                               rtol=2e-2, atol=2e-2)
    print("KERNEL_OK")
</pallas_src>

<mosaic_0001>
module attributes {stable_mosaic.version = 11 : i64} {
  func.func @decoder_kernel(%arg0: i32, %arg1: memref<8x128xf32, #tpu.memory_space<vmem>>, %arg2: memref<128x448xbf16, #tpu.memory_space<vmem>>, %arg3: memref<128x128xbf16, #tpu.memory_space<vmem>>, %arg4: memref<128x512xbf16, #tpu.memory_space<vmem>>, %arg5: memref<256x128xbf16, #tpu.memory_space<vmem>>, %arg6: memref<1x128xf32, #tpu.memory_space<vmem>>, %arg7: memref<1x128xf32, #tpu.memory_space<vmem>>, %arg8: memref<8x32xf32, #tpu.memory_space<vmem>>, %arg9: memref<8x32xf32, #tpu.memory_space<vmem>>, %arg10: memref<8x128xf32, #tpu.memory_space<vmem>>, %arg11: memref<8x128xf32, #tpu.memory_space<vmem>>) attributes {dimension_semantics = [#tpu.dimension_semantics<parallel>], iteration_bounds = array<i64: 2>, scalar_prefetch = 0 : i64, scratch_operands = 1 : i64, tpu.core_type = #tpu.core_type<tc>, window_params = [{transform_indices = @transform_0, window_bounds = array<i64: 8, 128>}, {pipeline_mode = #tpu.pipeline_mode<synchronous>, transform_indices = @transform_1, window_bounds = array<i64: 128, 448>}, {pipeline_mode = #tpu.pipeline_mode<synchronous>, transform_indices = @transform_2, window_bounds = array<i64: 128, 128>}, {pipeline_mode = #tpu.pipeline_mode<synchronous>, transform_indices = @transform_3, window_bounds = array<i64: 128, 512>}, {pipeline_mode = #tpu.pipeline_mode<synchronous>, transform_indices = @transform_4, window_bounds = array<i64: 256, 128>}, {pipeline_mode = #tpu.pipeline_mode<synchronous>, transform_indices = @transform_5, window_bounds = array<i64: 1, 128>}, {pipeline_mode = #tpu.pipeline_mode<synchronous>, transform_indices = @transform_6, window_bounds = array<i64: 1, 128>}, {pipeline_mode = #tpu.pipeline_mode<synchronous>, transform_indices = @transform_7, window_bounds = array<i64: 8, 32>}, {pipeline_mode = #tpu.pipeline_mode<synchronous>, transform_indices = @transform_8, window_bounds = array<i64: 8, 32>}, {transform_indices = @transform_9, window_bounds = array<i64: 8, 128>}]} {
    %c0 = arith.constant 0 : index
    %c0_0 = arith.constant 0 : index
    %0 = vector.load %arg1[%c0, %c0_0] : memref<8x128xf32, #tpu.memory_space<vmem>>, vector<8x128xf32>
    %1 = tpu.iota {dimensions = array<i32: 0>} : vector<8x8xi32>
    %2 = tpu.iota {dimensions = array<i32: 1>} : vector<8x8xi32>
    %3 = arith.cmpi sle, %2, %1 : vector<8x8xi32>
    %c0_1 = arith.constant 0 : index
    %c0_2 = arith.constant 0 : index
    %4 = vector.load %arg8[%c0_1, %c0_2] : memref<8x32xf32, #tpu.memory_space<vmem>>, vector<8x32xf32>
    %5 = tpu.concatenate %4, %4, %4, %4 in 1 : vector<8x32xf32>, vector<8x32xf32>, vector<8x32xf32>, vector<8x32xf32> -> vector<8x128xf32>
    %c0_3 = arith.constant 0 : index
    %c0_4 = arith.constant 0 : index
    %6 = vector.load %arg9[%c0_3, %c0_4] : memref<8x32xf32, #tpu.memory_space<vmem>>, vector<8x32xf32>
    %7 = tpu.concatenate %6, %6, %6, %6 in 1 : vector<8x32xf32>, vector<8x32xf32>, vector<8x32xf32>, vector<8x32xf32> -> vector<8x128xf32>
    %c0_5 = arith.constant 0 : index
    %c0_6 = arith.constant 0 : index
    %8 = vector.load %arg6[%c0_5, %c0_6] : memref<1x128xf32, #tpu.memory_space<vmem>>, vector<1x128xf32>
    %9 = arith.mulf %0, %0 : vector<8x128xf32>
    %cst = arith.constant dense<0.000000e+00> : vector<8xf32>
    %10 = vector.multi_reduction <add>, %9, %cst [1] : vector<8x128xf32> to vector<8xf32>
    %11 = vector.shape_cast %10 : vector<8xf32> to vector<8x1xf32>
    %cst_7 = arith.constant 1.280000e+02 : f32
    %12 = vector.broadcast %cst_7 : f32 to vector<8x1xf32>
    %13 = arith.divf %11, %12 : vector<8x1xf32>
    %cst_8 = arith.constant 9.99999974E-6 : f32
    %14 = vector.broadcast %cst_8 : f32 to vector<8x1xf32>
    %15 = arith.addf %13, %14 : vector<8x1xf32>
    %16 = math.rsqrt %15 : vector<8x1xf32>
    %17 = vector.broadcast %16 : vector<8x1xf32> to vector<8x128xf32>
    %18 = arith.mulf %0, %17 : vector<8x128xf32>
    %19 = vector.broadcast %8 : vector<1x128xf32> to vector<8x128xf32>
    %20 = arith.mulf %18, %19 : vector<8x128xf32>
    %21 = arith.truncf %20 : vector<8x128xf32> to vector<8x128xbf16>
    %c0_9 = arith.constant 0 : index
    %c0_10 = arith.constant 0 : index
    %22 = vector.load %arg2[%c0_9, %c0_10] : memref<128x448xbf16, #tpu.memory_space<vmem>>, vector<128x448xbf16>
    %cst_11 = arith.constant dense<0.000000e+00> : vector<8x448xf32>
    %23 = tpu.matmul %21, %22, %cst_11 {dimension_numbers = #tpu.dot_dimension_numbers<[1], [0], [0], [1], [0, 0, 1, 1], [], []>} : vector<8x128xbf16>, vector<128x448xbf16>, vector<8x448xf32> -> vector<8x448xf32>
    %24 = vector.extract_strided_slice %23 {offsets = [0, 0], sizes = [8, 128], strides = [1, 1]} : vector<8x448xf32> to vector<8x128xf32>
    %25 = vector.extract_strided_slice %23 {offsets = [0, 128], sizes = [8, 128], strides = [1, 1]} : vector<8x448xf32> to vector<8x128xf32>
    %26 = vector.extract_strided_slice %23 {offsets = [0, 256], sizes = [8, 64], strides = [1, 1]} : vector<8x448xf32> to vector<8x64xf32>
    %27 = vector.extract_strided_slice %23 {offsets = [0, 320], sizes = [8, 64], strides = [1, 1]} : vector<8x448xf32> to vector<8x64xf32>
    %28 = vector.extract_strided_slice %23 {offsets = [0, 384], sizes = [8, 64], strides = [1, 1]} : vector<8x448xf32> to vector<8x64xf32>
    %29 = arith.mulf %24, %5 : vector<8x128xf32>
    %30 = arith.mulf %25, %7 : vector<8x128xf32>
    %31 = arith.addf %29, %30 : vector<8x128xf32>
    %32 = vector.extract_strided_slice %5 {offsets = [0, 0], sizes = [8, 64], strides = [1, 1]} : vector<8x128xf32> to vector<8x64xf32>
    %33 = arith.mulf %26, %32 : vector<8x64xf32>
    %34 = vector.extract_strided_slice %7 {offsets = [0, 0], sizes = [8, 64], strides = [1, 1]} : vector<8x128xf32> to vector<8x64xf32>
    %35 = arith.mulf %27, %34 : vector<8x64xf32>
    %36 = arith.addf %33, %35 : vector<8x64xf32>
    %37 = vector.extract_strided_slice %31 {offsets = [0, 0], sizes = [8, 32], strides = [1, 1]} : vector<8x128xf32> to vector<8x32xf32>
    %38 = vector.extract_strided_slice %36 {offsets = [0, 0], sizes = [8, 32], strides = [1, 1]} : vector<8x64xf32> to vector<8x32xf32>
    %39 = vector.extract_strided_slice %28 {offsets = [0, 0], sizes = [8, 32], strides = [1, 1]} : vector<8x64xf32> to vector<8x32xf32>
    %40 = arith.truncf %37 : vector<8x32xf32> to vector<8x32xbf16>
    %41 = arith.truncf %38 : vector<8x32xf32> to vector<8x32xbf16>
    %cst_12 = arith.constant dense<0.000000e+00> : vector<8x8xf32>
    %42 = tpu.matmul %40, %41, %cst_12 {dimension_numbers = #tpu.dot_dimension_numbers<[1], [1], [0], [0], [0, 0, 1, 0], [], []>} : vector<8x32xbf16>, vector<8x32xbf16>, vector<8x8xf32> -> vector<8x8xf32>
    %cst_13 = arith.constant -1.000000e+30 : f32
    %43 = vector.broadcast %cst_13 : f32 to vector<8x8xf32>
    %44 = arith.select %3, %42, %43 : vector<8x8xi1>, vector<8x8xf32>
    %cst_14 = arith.constant dense<0xFF800000> : vector<8xf32>
    %45 = vector.multi_reduction <maximumf>, %44, %cst_14 [1] : vector<8x8xf32> to vector<8xf32>
    %46 = vector.shape_cast %45 : vector<8xf32> to vector<8x1xf32>
    %47 = vector.broadcast %46 : vector<8x1xf32> to vector<8x8xf32>
    %48 = arith.subf %44, %47 : vector<8x8xf32>
    %49 = math.exp %48 : vector<8x8xf32>
    %cst_15 = arith.constant dense<0.000000e+00> : vector<8xf32>
    %50 = vector.multi_reduction <add>, %49, %cst_15 [1] : vector<8x8xf32> to vector<8xf32>
    %51 = vector.shape_cast %50 : vector<8xf32> to vector<8x1xf32>
    %52 = tpu.reciprocal %51 {approx = true} : vector<8x1xf32> -> vector<8x1xf32>
    %53 = vector.broadcast %52 : vector<8x1xf32> to vector<8x8xf32>
    %54 = arith.mulf %49, %53 : vector<8x8xf32>
    %55 = arith.truncf %54 : vector<8x8xf32> to vector<8x8xbf16>
    %56 = arith.truncf %39 : vector<8x32xf32> to vector<8x32xbf16>
    %cst_16 = arith.constant dense<0.000000e+00> : vector<8x32xf32>
    %57 = tpu.matmul %55, %56, %cst_16 {dimension_numbers = #tpu.dot_dimension_numbers<[1], [0], [0], [1], [0, 0, 1, 1], [], []>} : vector<8x8xbf16>, vector<8x32xbf16>, vector<8x32xf32> -> vector<8x32xf32>
    %c0_17 = arith.constant 0 : index
    %c0_18 = arith.constant 0 : index
    %58 = vector.load %arg11[%c0_17, %c0_18] : memref<8x128xf32, #tpu.memory_space<vmem>>, vector<8x32xf32>
    tpu.vector_store %arg11[%c0_17, %c0_18], %57 {strides = array<i32>} : memref<8x128xf32, #tpu.memory_space<vmem>>, vector<8x32xf32>,
    %59 = vector.extract_strided_slice %31 {offsets = [0, 32], sizes = [8, 32], strides = [1, 1]} : vector<8x128xf32> to vector<8x32xf32>
    %60 = vector.extract_strided_slice %36 {offsets = [0, 0], sizes = [8, 32], strides = [1, 1]} : vector<8x64xf32> to vector<8x32xf32>
    %61 = vector.extract_strided_slice %28 {offsets = [0, 0], sizes = [8, 32], strides = [1, 1]} : vector<8x64xf32> to vector<8x32xf32>
    %62 = arith.truncf %59 : vector<8x32xf32> to vector<8x32xbf16>
    %63 = arith.truncf %60 : vector<8x32xf32> to vector<8x32xbf16>
    %cst_19 = arith.constant dense<0.000000e+00> : vector<8x8xf32>
    %64 = tpu.matmul %62, %63, %cst_19 {dimension_numbers = #tpu.dot_dimension_numbers<[1], [1], [0], [0], [0, 0, 1, 0], [], []>} : vector<8x32xbf16>, vector<8x32xbf16>, vector<8x8xf32> -> vector<8x8xf32>
    %cst_20 = arith.constant -1.000000e+30 : f32
    %65 = vector.broadcast %cst_20 : f32 to vector<8x8xf32>
    %66 = arith.select %3, %64, %65 : vector<8x8xi1>, vector<8x8xf32>
    %cst_21 = arith.constant dense<0xFF800000> : vector<8xf32>
    %67 = vector.multi_reduction <maximumf>, %66, %cst_21 [1] : vector<8x8xf32> to vector<8xf32>
    %68 = vector.shape_cast %67 : vector<8xf32> to vector<8x1xf32>
    %69 = vector.broadcast %68 : vector<8x1xf32> to vector<8x8xf32>
    %70 = arith.subf %66, %69 : vector<8x8xf32>
    %71 = math.exp %70 : vector<8x8xf32>
    %cst_22 = arith.constant dense<0.000000e+00> : vector<8xf32>
    %72 = vector.multi_reduction <add>, %71, %cst_22 [1] : vector<8x8xf32> to vector<8xf32>
    %73 = vector.shape_cast %72 : vector<8xf32> to vector<8x1xf32>
    %74 = tpu.reciprocal %73 {approx = true} : vector<8x1xf32> -> vector<8x1xf32>
    %75 = vector.broadcast %74 : vector<8x1xf32> to vector<8x8xf32>
    %76 = arith.mulf %71, %75 : vector<8x8xf32>
    %77 = arith.truncf %76 : vector<8x8xf32> to vector<8x8xbf16>
    %78 = arith.truncf %61 : vector<8x32xf32> to vector<8x32xbf16>
    %cst_23 = arith.constant dense<0.000000e+00> : vector<8x32xf32>
    %79 = tpu.matmul %77, %78, %cst_23 {dimension_numbers = #tpu.dot_dimension_numbers<[1], [0], [0], [1], [0, 0, 1, 1], [], []>} : vector<8x8xbf16>, vector<8x32xbf16>, vector<8x32xf32> -> vector<8x32xf32>
    %c0_24 = arith.constant 0 : index
    %c32 = arith.constant 32 : index
    %80 = vector.load %arg11[%c0_24, %c32] : memref<8x128xf32, #tpu.memory_space<vmem>>, vector<8x32xf32>
    tpu.vector_store %arg11[%c0_24, %c32], %79 {strides = array<i32>} : memref<8x128xf32, #tpu.memory_space<vmem>>, vector<8x32xf32>,
    %81 = vector.extract_strided_slice %31 {offsets = [0, 64], sizes = [8, 32], strides = [1, 1]} : vector<8x128xf32> to vector<8x32xf32>
    %82 = vector.extract_strided_slice %36 {offsets = [0, 32], sizes = [8, 32], strides = [1, 1]} : vector<8x64xf32> to vector<8x32xf32>
    %83 = vector.extract_strided_slice %28 {offsets = [0, 32], sizes = [8, 32], strides = [1, 1]} : vector<8x64xf32> to vector<8x32xf32>
    %84 = arith.truncf %81 : vector<8x32xf32> to vector<8x32xbf16>
    %85 = arith.truncf %82 : vector<8x32xf32> to vector<8x32xbf16>
    %cst_25 = arith.constant dense<0.000000e+00> : vector<8x8xf32>
    %86 = tpu.matmul %84, %85, %cst_25 {dimension_numbers = #tpu.dot_dimension_numbers<[1], [1], [0], [0], [0, 0, 1, 0], [], []>} : vector<8x32xbf16>, vector<8x32xbf16>, vector<8x8xf32> -> vector<8x8xf32>
    %cst_26 = arith.constant -1.000000e+30 : f32
    %87 = vector.broadcast %cst_26 : f32 to vector<8x8xf32>
    %88 = arith.select %3, %86, %87 : vector<8x8xi1>, vector<8x8xf32>
    %cst_27 = arith.constant dense<0xFF800000> : vector<8xf32>
    %89 = vector.multi_reduction <maximumf>, %88, %cst_27 [1] : vector<8x8xf32> to vector<8xf32>
    %90 = vector.shape_cast %89 : vector<8xf32> to vector<8x1xf32>
    %91 = vector.broadcast %90 : vector<8x1xf32> to vector<8x8xf32>
    %92 = arith.subf %88, %91 : vector<8x8xf32>
    %93 = math.exp %92 : vector<8x8xf32>
    %cst_28 = arith.constant dense<0.000000e+00> : vector<8xf32>
    %94 = vector.multi_reduction <add>, %93, %cst_28 [1] : vector<8x8xf32> to vector<8xf32>
    %95 = vector.shape_cast %94 : vector<8xf32> to vector<8x1xf32>
    %96 = tpu.reciprocal %95 {approx = true} : vector<8x1xf32> -> vector<8x1xf32>
    %97 = vector.broadcast %96 : vector<8x1xf32> to vector<8x8xf32>
    %98 = arith.mulf %93, %97 : vector<8x8xf32>
    %99 = arith.truncf %98 : vector<8x8xf32> to vector<8x8xbf16>
    %100 = arith.truncf %83 : vector<8x32xf32> to vector<8x32xbf16>
    %cst_29 = arith.constant dense<0.000000e+00> : vector<8x32xf32>
    %101 = tpu.matmul %99, %100, %cst_29 {dimension_numbers = #tpu.dot_dimension_numbers<[1], [0], [0], [1], [0, 0, 1, 1], [], []>} : vector<8x8xbf16>, vector<8x32xbf16>, vector<8x32xf32> -> vector<8x32xf32>
    %c0_30 = arith.constant 0 : index
    %c64 = arith.constant 64 : index
    %102 = vector.load %arg11[%c0_30, %c64] : memref<8x128xf32, #tpu.memory_space<vmem>>, vector<8x32xf32>
    tpu.vector_store %arg11[%c0_30, %c64], %101 {strides = array<i32>} : memref<8x128xf32, #tpu.memory_space<vmem>>, vector<8x32xf32>,
    %103 = vector.extract_strided_slice %31 {offsets = [0, 96], sizes = [8, 32], strides = [1, 1]} : vector<8x128xf32> to vector<8x32xf32>
    %104 = vector.extract_strided_slice %36 {offsets = [0, 32], sizes = [8, 32], strides = [1, 1]} : vector<8x64xf32> to vector<8x32xf32>
    %105 = vector.extract_strided_slice %28 {offsets = [0, 32], sizes = [8, 32], strides = [1, 1]} : vector<8x64xf32> to vector<8x32xf32>
    %106 = arith.truncf %103 : vector<8x32xf32> to vector<8x32xbf16>
    %107 = arith.truncf %104 : vector<8x32xf32> to vector<8x32xbf16>
    %cst_31 = arith.constant dense<0.000000e+00> : vector<8x8xf32>
    %108 = tpu.matmul %106, %107, %cst_31 {dimension_numbers = #tpu.dot_dimension_numbers<[1], [1], [0], [0], [0, 0, 1, 0], [], []>} : vector<8x32xbf16>, vector<8x32xbf16>, vector<8x8xf32> -> vector<8x8xf32>
    %cst_32 = arith.constant -1.000000e+30 : f32
    %109 = vector.broadcast %cst_32 : f32 to vector<8x8xf32>
    %110 = arith.select %3, %108, %109 : vector<8x8xi1>, vector<8x8xf32>
    %cst_33 = arith.constant dense<0xFF800000> : vector<8xf32>
    %111 = vector.multi_reduction <maximumf>, %110, %cst_33 [1] : vector<8x8xf32> to vector<8xf32>
    %112 = vector.shape_cast %111 : vector<8xf32> to vector<8x1xf32>
    %113 = vector.broadcast %112 : vector<8x1xf32> to vector<8x8xf32>
    %114 = arith.subf %110, %113 : vector<8x8xf32>
    %115 = math.exp %114 : vector<8x8xf32>
    %cst_34 = arith.constant dense<0.000000e+00> : vector<8xf32>
    %116 = vector.multi_reduction <add>, %115, %cst_34 [1] : vector<8x8xf32> to vector<8xf32>
    %117 = vector.shape_cast %116 : vector<8xf32> to vector<8x1xf32>
    %118 = tpu.reciprocal %117 {approx = true} : vector<8x1xf32> -> vector<8x1xf32>
    %119 = vector.broadcast %118 : vector<8x1xf32> to vector<8x8xf32>
    %120 = arith.mulf %115, %119 : vector<8x8xf32>
    %121 = arith.truncf %120 : vector<8x8xf32> to vector<8x8xbf16>
    %122 = arith.truncf %105 : vector<8x32xf32> to vector<8x32xbf16>
    %cst_35 = arith.constant dense<0.000000e+00> : vector<8x32xf32>
    %123 = tpu.matmul %121, %122, %cst_35 {dimension_numbers = #tpu.dot_dimension_numbers<[1], [0], [0], [1], [0, 0, 1, 1], [], []>} : vector<8x8xbf16>, vector<8x32xbf16>, vector<8x32xf32> -> vector<8x32xf32>
    %c0_36 = arith.constant 0 : index
    %c96 = arith.constant 96 : index
    %124 = vector.load %arg11[%c0_36, %c96] : memref<8x128xf32, #tpu.memory_space<vmem>>, vector<8x32xf32>
    tpu.vector_store %arg11[%c0_36, %c96], %123 {strides = array<i32>} : memref<8x128xf32, #tpu.memory_space<vmem>>, vector<8x32xf32>,
    %c0_37 = arith.constant 0 : index
    %c0_38 = arith.constant 0 : index
    %125 = vector.load %arg11[%c0_37, %c0_38] : memref<8x128xf32, #tpu.memory_space<vmem>>, vector<8x128xf32>
    %126 = arith.truncf %125 : vector<8x128xf32> to vector<8x128xbf16>
    %c0_39 = arith.constant 0 : index
    %c0_40 = arith.constant 0 : index
    %127 = vector.load %arg3[%c0_39, %c0_40] : memref<128x128xbf16, #tpu.memory_space<vmem>>, vector<128x128xbf16>
    %cst_41 = arith.constant dense<0.000000e+00> : vector<8x128xf32>
    %128 = tpu.matmul %126, %127, %cst_41 {dimension_numbers = #tpu.dot_dimension_numbers<[1], [0], [0], [1], [0, 0, 1, 1], [], []>} : vector<8x128xbf16>, vector<128x128xbf16>, vector<8x128xf32> -> vector<8x128xf32>
    %129 = arith.addf %0, %128 : vector<8x128xf32>
    %c0_42 = arith.constant 0 : index
    %c0_43 = arith.constant 0 : index
    %130 = vector.load %arg7[%c0_42, %c0_43] : memref<1x128xf32, #tpu.memory_space<vmem>>, vector<1x128xf32>
    %131 = arith.mulf %129, %129 : vector<8x128xf32>
    %cst_44 = arith.constant dense<0.000000e+00> : vector<8xf32>
    %132 = vector.multi_reduction <add>, %131, %cst_44 [1] : vector<8x128xf32> to vector<8xf32>
    %133 = vector.shape_cast %132 : vector<8xf32> to vector<8x1xf32>
    %cst_45 = arith.constant 1.280000e+02 : f32
    %134 = vector.broadcast %cst_45 : f32 to vector<8x1xf32>
    %135 = arith.divf %133, %134 : vector<8x1xf32>
    %cst_46 = arith.constant 9.99999974E-6 : f32
    %136 = vector.broadcast %cst_46 : f32 to vector<8x1xf32>
    %137 = arith.addf %135, %136 : vector<8x1xf32>
    %138 = math.rsqrt %137 : vector<8x1xf32>
    %139 = vector.broadcast %138 : vector<8x1xf32> to vector<8x128xf32>
    %140 = arith.mulf %129, %139 : vector<8x128xf32>
    %141 = vector.broadcast %130 : vector<1x128xf32> to vector<8x128xf32>
    %142 = arith.mulf %140, %141 : vector<8x128xf32>
    %143 = arith.truncf %142 : vector<8x128xf32> to vector<8x128xbf16>
    %c0_47 = arith.constant 0 : index
    %c0_48 = arith.constant 0 : index
    %144 = vector.load %arg4[%c0_47, %c0_48] : memref<128x512xbf16, #tpu.memory_space<vmem>>, vector<128x512xbf16>
    %cst_49 = arith.constant dense<0.000000e+00> : vector<8x512xf32>
    %145 = tpu.matmul %143, %144, %cst_49 {dimension_numbers = #tpu.dot_dimension_numbers<[1], [0], [0], [1], [0, 0, 1, 1], [], []>} : vector<8x128xbf16>, vector<128x512xbf16>, vector<8x512xf32> -> vector<8x512xf32>
    %146 = vector.extract_strided_slice %145 {offsets = [0, 0], sizes = [8, 256], strides = [1, 1]} : vector<8x512xf32> to vector<8x256xf32>
    %147 = vector.extract_strided_slice %145 {offsets = [0, 256], sizes = [8, 256], strides = [1, 1]} : vector<8x512xf32> to vector<8x256xf32>
    %148 = arith.negf %146 : vector<8x256xf32>
    %149 = math.exp %148 : vector<8x256xf32>
    %cst_50 = arith.constant 1.000000e+00 : f32
    %150 = vector.broadcast %cst_50 : f32 to vector<8x256xf32>
    %151 = arith.addf %150, %149 : vector<8x256xf32>
    %152 = arith.divf %150, %151 : vector<8x256xf32>
    %153 = arith.mulf %146, %152 : vector<8x256xf32>
    %154 = arith.mulf %153, %147 : vector<8x256xf32>
    %155 = arith.truncf %154 : vector<8x256xf32> to vector<8x256xbf16>
    %c0_51 = arith.constant 0 : index
    %c0_52 = arith.constant 0 : index
    %156 = vector.load %arg5[%c0_51, %c0_52] : memref<256x128xbf16, #tpu.memory_space<vmem>>, vector<256x128xbf16>
    %cst_53 = arith.constant dense<0.000000e+00> : vector<8x128xf32>
    %157 = tpu.matmul %155, %156, %cst_53 {dimension_numbers = #tpu.dot_dimension_numbers<[1], [0], [0], [1], [0, 0, 1, 1], [], []>} : vector<8x256xbf16>, vector<256x128xbf16>, vector<8x128xf32> -> vector<8x128xf32>
    %158 = arith.addf %129, %157 : vector<8x128xf32>
    %c0_54 = arith.constant 0 : index
    %c0_55 = arith.constant 0 : index
    %159 = vector.load %arg10[%c0_54, %c0_55] : memref<8x128xf32, #tpu.memory_space<vmem>>, vector<8x128xf32>
    tpu.vector_store %arg10[%c0_54, %c0_55], %158 {strides = array<i32>} : memref<8x128xf32, #tpu.memory_space<vmem>>, vector<8x128xf32>,
    return
  }
  func.func @transform_0(%arg0: i32) -> (i32, i32) {
    %c0_i32 = arith.constant 0 : i32
    %c0_i32_0 = arith.constant 0 : i32
    return %arg0, %c0_i32 : i32, i32
  }
  func.func @transform_1(%arg0: i32) -> (i32, i32) {
    %c0_i32 = arith.constant 0 : i32
    %c0_i32_0 = arith.constant 0 : i32
    %c0_i32_1 = arith.constant 0 : i32
    return %c0_i32, %c0_i32_0 : i32, i32
  }
  func.func @transform_2(%arg0: i32) -> (i32, i32) {
    %c0_i32 = arith.constant 0 : i32
    %c0_i32_0 = arith.constant 0 : i32
    %c0_i32_1 = arith.constant 0 : i32
    return %c0_i32, %c0_i32_0 : i32, i32
  }
  func.func @transform_3(%arg0: i32) -> (i32, i32) {
    %c0_i32 = arith.constant 0 : i32
    %c0_i32_0 = arith.constant 0 : i32
    %c0_i32_1 = arith.constant 0 : i32
    return %c0_i32, %c0_i32_0 : i32, i32
  }
  func.func @transform_4(%arg0: i32) -> (i32, i32) {
    %c0_i32 = arith.constant 0 : i32
    %c0_i32_0 = arith.constant 0 : i32
    %c0_i32_1 = arith.constant 0 : i32
    return %c0_i32, %c0_i32_0 : i32, i32
  }
  func.func @transform_5(%arg0: i32) -> (i32, i32) {
    %c0_i32 = arith.constant 0 : i32
    %c0_i32_0 = arith.constant 0 : i32
    %c0_i32_1 = arith.constant 0 : i32
    return %c0_i32, %c0_i32_0 : i32, i32
  }
  func.func @transform_6(%arg0: i32) -> (i32, i32) {
    %c0_i32 = arith.constant 0 : i32
    %c0_i32_0 = arith.constant 0 : i32
    %c0_i32_1 = arith.constant 0 : i32
    return %c0_i32, %c0_i32_0 : i32, i32
  }
  func.func @transform_7(%arg0: i32) -> (i32, i32) {
    %c0_i32 = arith.constant 0 : i32
    %c0_i32_0 = arith.constant 0 : i32
    %c0_i32_1 = arith.constant 0 : i32
    return %c0_i32, %c0_i32_0 : i32, i32
  }
  func.func @transform_8(%arg0: i32) -> (i32, i32) {
    %c0_i32 = arith.constant 0 : i32
    %c0_i32_0 = arith.constant 0 : i32
    %c0_i32_1 = arith.constant 0 : i32
    return %c0_i32, %c0_i32_0 : i32, i32
  }
  func.func @transform_9(%arg0: i32) -> (i32, i32) {
    %c0_i32 = arith.constant 0 : i32
    %c0_i32_0 = arith.constant 0 : i32
    return %arg0, %c0_i32 : i32, i32
  }
}

</mosaic_0001>

<llo_original>
// kernel: tpu_custom_call.1
$region0: #{tpu_custom_call.1}
  #allocation0 [shape = 'u32[]', space=smem, size = 0x4, offset = 0x4, fixed_abs, tag = 'smem constant byte address 0x4 - core index']
  #allocation1 [shape = 'u32[144,128]{1,0:T(1,128)}', space=vmem, size = 0x12000, scoped, tag = 'internal scratch']
  #allocation2 [shape = 'f32[8,128]{1,0:T(8,128)}', space=vmem, size = 0x1000, scoped, tag = 'scratch operand']
  %s0 = inlined_call_operand.vmem [shape: f32[16,128], index: 0, kind: input, shape index: {}]
  %s1 = inlined_call_operand.vmem [shape: bf16[128,448], index: 1, kind: input, shape index: {}]
  %s2 = inlined_call_operand.vmem [shape: bf16[128,128], index: 2, kind: input, shape index: {}]
  %s3 = inlined_call_operand.vmem [shape: bf16[128,512], index: 3, kind: input, shape index: {}]
  %s4 = inlined_call_operand.vmem [shape: bf16[256,128], index: 4, kind: input, shape index: {}]
  %s5 = inlined_call_operand.vmem [shape: f32[1,128], index: 5, kind: input, shape index: {}]
  %s6 = inlined_call_operand.vmem [shape: f32[1,128], index: 6, kind: input, shape index: {}]
  %s7 = inlined_call_operand.vmem [shape: f32[8,32], index: 7, kind: input, shape index: {}]
  %s8 = inlined_call_operand.vmem [shape: f32[8,32], index: 8, kind: input, shape index: {}]
  %s9 = inlined_call_operand.hbm [shape: f32[16,128], index: 9, kind: output, shape index: {}]
  %s10 = sld [smem:[#allocation0]]
  $region69: #{tpu_custom_call.1} parent=0
    _
  %s12 = ssub.s32 1, %s10
  %s13 = scalar_select 0, %s12, %s10
  $region1: #{tpu_custom_call.1} parent=0
    #allocation3 [shape = 'u8[8192]{0}', space=vmem, size = 0x2000, scoped, tag = 'output window, operand 0']
    #allocation4 [shape = 's32[2]{0}', space=sflag, size = 0x8, scoped, tag = 'scoped memory for tpu_custom_call.1']
    %14 = vsyncpa [#allocation4], 0
    %s15 = scalar_lea.sflag [#allocation4], 1
    %16 = vsyncpa %s15, 0
    loop: start=0, step=1, limit=4
    $region2: #{tpu_custom_call.1} parent=1 // loop_pre_header
      _
    $region3: #{tpu_custom_call.1} parent=1 // loop_header
      %s18 = sphi 0, %s22
      %p19 = scmp.ge.s32.totalorder %s18, 4
      %s28 = sphi 0, %s30
      %s31 = sphi 0, %s28
      %s32 = sphi 0, %s31
      %s48 = sphi 0, %s32
      %s52 = sphi 0, %s52
      %s54 = sphi 0, %s52
      %s55 = sphi 0, %s54
      %s69 = sphi 0, %s55
      %s73 = sphi 0, %s73
      %s75 = sphi 0, %s73
      %s76 = sphi 0, %s75
      %s90 = sphi 0, %s76
      %s94 = sphi 0, %s94
      %s96 = sphi 0, %s94
      %s97 = sphi 0, %s96
      %s111 = sphi 0, %s97
      %s115 = sphi 0, %s115
      %s117 = sphi 0, %s115
      %s118 = sphi 0, %s117
      %s132 = sphi 0, %s118
      %s136 = sphi 0, %s136
      %s138 = sphi 0, %s136
      %s139 = sphi 0, %s138
      %s153 = sphi 0, %s139
      %s157 = sphi 0, %s157
      %s159 = sphi 0, %s157
      %s160 = sphi 0, %s159
      %s174 = sphi 0, %s160
      %s178 = sphi 0, %s178
      %s180 = sphi 0, %s178
      %s181 = sphi 0, %s180
      %s195 = sphi 0, %s181
      %s199 = sphi 0, %s199
      %s201 = sphi 0, %s199
      %s202 = sphi 0, %s201
      %s216 = sphi 0, %s202
      %s222 = sphi 0, %s224
      %s225 = sphi 0, %s222
      %s226 = sphi 0, %s225
      %s242 = sphi 0, %s226
    $region4: #{tpu_custom_call.1} parent=1 // loop_header_branch
      %21 = sbr.rel (%p19) target = $region8
    $region5: #{tpu_custom_call.1} parent=1 // loop_body
      %s23 = ssub.s32 %s18, 1
      %s24 = ssub.s32 %s18, 2
      %s25 = sadd.s32 %s18, 1
      %s26 = ssub.s32 %s18, %s25
      %p27 = scmp.eq.s32.totalorder %s26, 0
      %s29 = sadd.s32 %s28, 1
      %s30 = scalar_select %p27, %s28, %s29
      %p33 = pneg %p27
      %p34 = scmp.eq.s32.totalorder %s18, 1
      %p35 = por %p33, %p34
      %p36 = scmp.ne.s32.totalorder %s28, %s31
      %p37 = scmp.eq.s32.totalorder %s18, 0
      %p38 = por %p36, %p37
      %p39 = scmp.ne.s32.totalorder %s28, %s31
      %p40 = scmp.eq.s32.totalorder %s23, 1
      %p41 = por %p39, %p40
      %p42 = scmp.ne.s32.totalorder %s31, %s32
      %p43 = scmp.eq.s32.totalorder %s23, 0
      %p44 = por %p42, %p43
      %p45 = scmp.ne.s32.totalorder %s31, %s32
      %p46 = scmp.eq.s32.totalorder %s24, 1
      %p47 = por %p45, %p46
      %p49 = scmp.ne.s32.totalorder %s32, %s48
      %p50 = scmp.eq.s32.totalorder %s24, 0
      %p51 = por %p49, %p50
      %s53 = sadd.s32 %s52, 1
      %p56 = scmp.eq.s32.totalorder %s18, 1
      %p57 = scmp.ne.s32.totalorder %s52, %s54
      %p58 = scmp.eq.s32.totalorder %s18, 0
      %p59 = por %p57, %p58
      %p60 = scmp.ne.s32.totalorder %s52, %s54
      %p61 = scmp.eq.s32.totalorder %s23, 1
      %p62 = por %p60, %p61
      %p63 = scmp.ne.s32.totalorder %s54, %s55
      %p64 = scmp.eq.s32.totalorder %s23, 0
      %p65 = por %p63, %p64
      %p66 = scmp.ne.s32.totalorder %s54, %s55
      %p67 = scmp.eq.s32.totalorder %s24, 1
      %p68 = por %p66, %p67
      %p70 = scmp.ne.s32.totalorder %s55, %s69
      %p71 = scmp.eq.s32.totalorder %s24, 0
      %p72 = por %p70, %p71
      %s74 = sadd.s32 %s73, 1
      %p77 = scmp.eq.s32.totalorder %s18, 1
      %p78 = scmp.ne.s32.totalorder %s73, %s75
      %p79 = scmp.eq.s32.totalorder %s18, 0
      %p80 = por %p78, %p79
      %p81 = scmp.ne.s32.totalorder %s73, %s75
      %p82 = scmp.eq.s32.totalorder %s23, 1
      %p83 = por %p81, %p82
      %p84 = scmp.ne.s32.totalorder %s75, %s76
      %p85 = scmp.eq.s32.totalorder %s23, 0
      %p86 = por %p84, %p85
      %p87 = scmp.ne.s32.totalorder %s75, %s76
      %p88 = scmp.eq.s32.totalorder %s24, 1
      %p89 = por %p87, %p88
      %p91 = scmp.ne.s32.totalorder %s76, %s90
      %p92 = scmp.eq.s32.totalorder %s24, 0
      %p93 = por %p91, %p92
      %s95 = sadd.s32 %s94, 1
      %p98 = scmp.eq.s32.totalorder %s18, 1
      %p99 = scmp.ne.s32.totalorder %s94, %s96
      %p100 = scmp.eq.s32.totalorder %s18, 0
      %p101 = por %p99, %p100
      %p102 = scmp.ne.s32.totalorder %s94, %s96
      %p103 = scmp.eq.s32.totalorder %s23, 1
      %p104 = por %p102, %p103
      %p105 = scmp.ne.s32.totalorder %s96, %s97
      %p106 = scmp.eq.s32.totalorder %s23, 0
      %p107 = por %p105, %p106
      %p108 = scmp.ne.s32.totalorder %s96, %s97
      %p109 = scmp.eq.s32.totalorder %s24, 1
      %p110 = por %p108, %p109
      %p112 = scmp.ne.s32.totalorder %s97, %s111
      %p113 = scmp.eq.s32.totalorder %s24, 0
      %p114 = por %p112, %p113
      %s116 = sadd.s32 %s115, 1
      %p119 = scmp.eq.s32.totalorder %s18, 1
      %p120 = scmp.ne.s32.totalorder %s115, %s117
      %p121 = scmp.eq.s32.totalorder %s18, 0
      %p122 = por %p120, %p121
      %p123 = scmp.ne.s32.totalorder %s115, %s117
      %p124 = scmp.eq.s32.totalorder %s23, 1
      %p125 = por %p123, %p124
      %p126 = scmp.ne.s32.totalorder %s117, %s118
      %p127 = scmp.eq.s32.totalorder %s23, 0
      %p128 = por %p126, %p127
      %p129 = scmp.ne.s32.totalorder %s117, %s118
      %p130 = scmp.eq.s32.totalorder %s24, 1
      %p131 = por %p129, %p130
      %p133 = scmp.ne.s32.totalorder %s118, %s132
      %p134 = scmp.eq.s32.totalorder %s24, 0
      %p135 = por %p133, %p134
      %s137 = sadd.s32 %s136, 1
      %p140 = scmp.eq.s32.totalorder %s18, 1
      %p141 = scmp.ne.s32.totalorder %s136, %s138
      %p142 = scmp.eq.s32.totalorder %s18, 0
      %p143 = por %p141, %p142
      %p144 = scmp.ne.s32.totalorder %s136, %s138
      %p145 = scmp.eq.s32.totalorder %s23, 1
      %p146 = por %p144, %p145
      %p147 = scmp.ne.s32.totalorder %s138, %s139
      %p148 = scmp.eq.s32.totalorder %s23, 0
      %p149 = por %p147, %p148
      %p150 = scmp.ne.s32.totalorder %s138, %s139
      %p151 = scmp.eq.s32.totalorder %s24, 1
      %p152 = por %p150, %p151
      %p154 = scmp.ne.s32.totalorder %s139, %s153
      %p155 = scmp.eq.s32.totalorder %s24, 0
      %p156 = por %p154, %p155
      %s158 = sadd.s32 %s157, 1
      %p161 = scmp.eq.s32.totalorder %s18, 1
      %p162 = scmp.ne.s32.totalorder %s157, %s159
      %p163 = scmp.eq.s32.totalorder %s18, 0
      %p164 = por %p162, %p163
      %p165 = scmp.ne.s32.totalorder %s157, %s159
      %p166 = scmp.eq.s32.totalorder %s23, 1
      %p167 = por %p165, %p166
      %p168 = scmp.ne.s32.totalorder %s159, %s160
      %p169 = scmp.eq.s32.totalorder %s23, 0
      %p170 = por %p168, %p169
      %p171 = scmp.ne.s32.totalorder %s159, %s160
      %p172 = scmp.eq.s32.totalorder %s24, 1
      %p173 = por %p171, %p172
      %p175 = scmp.ne.s32.totalorder %s160, %s174
      %p176 = scmp.eq.s32.totalorder %s24, 0
      %p177 = por %p175, %p176
      %s179 = sadd.s32 %s178, 1
      %p182 = scmp.eq.s32.totalorder %s18, 1
      %p183 = scmp.ne.s32.totalorder %s178, %s180
      %p184 = scmp.eq.s32.totalorder %s18, 0
      %p185 = por %p183, %p184
      %p186 = scmp.ne.s32.totalorder %s178, %s180
      %p187 = scmp.eq.s32.totalorder %s23, 1
      %p188 = por %p186, %p187
      %p189 = scmp.ne.s32.totalorder %s180, %s181
      %p190 = scmp.eq.s32.totalorder %s23, 0
      %p191 = por %p189, %p190
      %p192 = scmp.ne.s32.totalorder %s180, %s181
      %p193 = scmp.eq.s32.totalorder %s24, 1
      %p194 = por %p192, %p193
      %p196 = scmp.ne.s32.totalorder %s181, %s195
      %p197 = scmp.eq.s32.totalorder %s24, 0
      %p198 = por %p196, %p197
      %s200 = sadd.s32 %s199, 1
      %p203 = scmp.eq.s32.totalorder %s18, 1
      %p204 = scmp.ne.s32.totalorder %s199, %s201
      %p205 = scmp.eq.s32.totalorder %s18, 0
      %p206 = por %p204, %p205
      %p207 = scmp.ne.s32.totalorder %s199, %s201
      %p208 = scmp.eq.s32.totalorder %s23, 1
      %p209 = por %p207, %p208
      %p210 = scmp.ne.s32.totalorder %s201, %s202
      %p211 = scmp.eq.s32.totalorder %s23, 0
      %p212 = por %p210, %p211
      %p213 = scmp.ne.s32.totalorder %s201, %s202
      %p214 = scmp.eq.s32.totalorder %s24, 1
      %p215 = por %p213, %p214
      %p217 = scmp.ne.s32.totalorder %s202, %s216
      %p218 = scmp.eq.s32.totalorder %s24, 0
      %p219 = por %p217, %p218
      %s220 = ssub.s32 %s18, %s25
      %p221 = scmp.eq.s32.totalorder %s220, 0
      %s223 = sadd.s32 %s222, 1
      %s224 = scalar_select %p221, %s222, %s223
      %p227 = pneg %p221
      %p228 = scmp.eq.s32.totalorder %s18, 1
      %p229 = por %p227, %p228
      %p230 = scmp.ne.s32.totalorder %s222, %s225
      %p231 = scmp.eq.s32.totalorder %s18, 0
      %p232 = por %p230, %p231
      %p233 = scmp.ne.s32.totalorder %s222, %s225
      %p234 = scmp.eq.s32.totalorder %s23, 1
      %p235 = por %p233, %p234
      %p236 = scmp.ne.s32.totalorder %s225, %s226
      %p237 = scmp.eq.s32.totalorder %s23, 0
      %p238 = por %p236, %p237
      %p239 = scmp.ne.s32.totalorder %s225, %s226
      %p240 = scmp.eq.s32.totalorder %s24, 1
      %p241 = por %p239, %p240
      %p243 = scmp.ne.s32.totalorder %s226, %s242
      %p244 = scmp.eq.s32.totalorder %s24, 0
      %p245 = por %p243, %p244
      %p246 = scmp.le.s32.totalorder 1, %s18
      %p247 = scmp.lt.s32.totalorder %s18, 3
      %p248 = pnand %p246, %p247
      %p249 = pneg %p248
      // Predicated region
      $region9: #{tpu_custom_call.1} parent=5 // pred_check
        _
      $region10: #{tpu_custom_call.1} parent=5 // pred_check_branch
        %251 = sbr.rel (%p248) target = $region12
      $region11: #{tpu_custom_call.1} parent=5 // pred_region
        %s252 = ssub.s32 %s18, 1
        // Predicated region
        $region13: #{tpu_custom_call.1} parent=11 // pred_check
          %p253 = pneg %p65
        $region14: #{tpu_custom_call.1} parent=11 // pred_check_branch
          %255 = sbr.rel (%p253) target = $region16
        $region15: #{tpu_custom_call.1} parent=11 // pred_region
          _
        $region16: #{tpu_custom_call.1} parent=11 // pred_fallthru
          _
        // Predicated region
        $region17: #{tpu_custom_call.1} parent=11 // pred_check
          %p256 = pneg %p86
        $region18: #{tpu_custom_call.1} parent=11 // pred_check_branch
          %258 = sbr.rel (%p256) target = $region20
        $region19: #{tpu_custom_call.1} parent=11 // pred_region
          _
        $region20: #{tpu_custom_call.1} parent=11 // pred_fallthru
          _
        // Predicated region
        $region21: #{tpu_custom_call.1} parent=11 // pred_check
          %p259 = pneg %p107
        $region22: #{tpu_custom_call.1} parent=11 // pred_check_branch
          %261 = sbr.rel (%p259) target = $region24
        $region23: #{tpu_custom_call.1} parent=11 // pred_region
          _
        $region24: #{tpu_custom_call.1} parent=11 // pred_fallthru
          _
        // Predicated region
        $region25: #{tpu_custom_call.1} parent=11 // pred_check
          %p262 = pneg %p128
        $region26: #{tpu_custom_call.1} parent=11 // pred_check_branch
          %264 = sbr.rel (%p262) target = $region28
        $region27: #{tpu_custom_call.1} parent=11 // pred_region
          _
        $region28: #{tpu_custom_call.1} parent=11 // pred_fallthru
          _
        // Predicated region
        $region29: #{tpu_custom_call.1} parent=11 // pred_check
          %p265 = pneg %p149
        $region30: #{tpu_custom_call.1} parent=11 // pred_check_branch
          %267 = sbr.rel (%p265) target = $region32
        $region31: #{tpu_custom_call.1} parent=11 // pred_region
          _
        $region32: #{tpu_custom_call.1} parent=11 // pred_fallthru
          _
        // Predicated region
        $region33: #{tpu_custom_call.1} parent=11 // pred_check
          %p268 = pneg %p170
        $region34: #{tpu_custom_call.1} parent=11 // pred_check_branch
          %270 = sbr.rel (%p268) target = $region36
        $region35: #{tpu_custom_call.1} parent=11 // pred_region
          _
        $region36: #{tpu_custom_call.1} parent=11 // pred_fallthru
          _
        // Predicated region
        $region37: #{tpu_custom_call.1} parent=11 // pred_check
          %p271 = pneg %p191
        $region38: #{tpu_custom_call.1} parent=11 // pred_check_branch
          %273 = sbr.rel (%p271) target = $region40
        $region39: #{tpu_custom_call.1} parent=11 // pred_region
          _
        $region40: #{tpu_custom_call.1} parent=11 // pred_fallthru
          _
        // Predicated region
        $region41: #{tpu_custom_call.1} parent=11 // pred_check
          %p274 = pneg %p212
        $region42: #{tpu_custom_call.1} parent=11 // pred_check_branch
          %276 = sbr.rel (%p274) target = $region44
        $region43: #{tpu_custom_call.1} parent=11 // pred_region
          _
        $region44: #{tpu_custom_call.1} parent=11 // pred_fallthru
          _
      $region12: #{tpu_custom_call.1} parent=5 // pred_fallthru
        _
      %p277 = scmp.lt.s32.totalorder %s18, 2
      // Predicated region
      $region45: #{tpu_custom_call.1} parent=5 // pred_check
        %p278 = pneg %p277
      $region46: #{tpu_custom_call.1} parent=5 // pred_check_branch
        %280 = sbr.rel (%p278) target = $region48
      $region47: #{tpu_custom_call.1} parent=5 // pred_region
        // Predicated region
        $region49: #{tpu_custom_call.1} parent=47 // pred_check
          %p281 = pneg %p38
        $region50: #{tpu_custom_call.1} parent=47 // pred_check_branch
          %283 = sbr.rel (%p281) target = $region52
        $region51: #{tpu_custom_call.1} parent=47 // pred_region
          %p284 = scmp.lt.s32.totalorder %s18, 1
          %s285 = scalar_select %p284, %s18, 1
          %s286 = smul.addr %s285, 8
          %s287 = scalar_lea.vmem %s0, %s286
        $region52: #{tpu_custom_call.1} parent=47 // pred_fallthru
          _
      $region48: #{tpu_custom_call.1} parent=5 // pred_fallthru
        _
      %p288 = scmp.le.s32.totalorder 1, %s18
      %p289 = scmp.lt.s32.totalorder %s18, 3
      %p290 = pnand %p288, %p289
      %p291 = pneg %p290
      // Predicated region
      $region53: #{tpu_custom_call.1} parent=5 // pred_check
        _
      $region54: #{tpu_custom_call.1} parent=5 // pred_check_branch
        %293 = sbr.rel (%p290) target = $region56
      $region55: #{tpu_custom_call.1} parent=5 // pred_region
        %s294 = ssub.s32 %s18, 1
        %p295 = scmp.lt.s32.totalorder %s23, 1
        %s296 = scalar_select %p295, %s23, 1
        %s297 = smul.addr %s296, 8
        %s298 = scalar_lea.vmem %s0, %s297
        %p299 = pneg %p44
        %p300 = pneg %p41
        %p301 = pneg %p65
        %p302 = pneg %p62
        %p303 = pneg %p86
        %p304 = pneg %p83
        %p305 = pneg %p107
        %p306 = pneg %p104
        %p307 = pneg %p128
        %p308 = pneg %p125
        %p309 = pneg %p149
        %p310 = pneg %p146
        %p311 = pneg %p170
        %p312 = pneg %p167
        %p313 = pneg %p191
        %p314 = pneg %p188
        %p315 = pneg %p212
        %p316 = pneg %p209
        %p317 = pneg %p238
        %p318 = pneg %p235
        %s319 = sand.u32 %s225, 1
        %s320 = scalar_lea.sflag [#allocation4], %s319
        %s321 = sand.u32 %s225, 1
        %s322 = smul.addr %s321, 8
        %s323 = scalar_lea.vmem [#allocation3], %s322
        %p324 = scmp.lt.s32.totalorder %s23, 1
        %s325 = scalar_select %p324, %s23, 1
        %s326 = smul.addr %s325, 8
        %s327 = scalar_lea.vmem %s0, %s326
        %v329 = vld [vmem:[%s327] sm:$0xff]
        %v330 = vlaneseq
        %v331 = vshrl.u32 %v330, 7
        %v332 = vlaneseq
        %v333 = vand.u32 %v332, 127
        %vm334 = vcmp.le.s32.totalorder %v333, %v331
        %v335 = vld [vmem:[%s7] sm:$0xff]
        %337 = vrot.lane.b32.xlu0 %v335, 32
        %v338 = vpop.permute.xlu0 %337
        %340 = vrot.lane.b32.xlu0 %v335, 64
        %v341 = vpop.permute.xlu0 %340
        %343 = vrot.lane.b32.xlu0 %v335, 96
        %v344 = vpop.permute.xlu0 %343
        %vm346 = vcmask 261120
        %v347 = vsel %vm346, %v335, %v338
        %vm348 = vcmask 523264
        %v349 = vsel %vm348, %v347, %v341
        %vm350 = vcmask 785408
        %v351 = vsel %vm350, %v349, %v344
        %v352 = vld [vmem:[%s8] sm:$0xff]
        %354 = vrot.lane.b32.xlu0 %v352, 32
        %v355 = vpop.permute.xlu0 %354
        %357 = vrot.lane.b32.xlu0 %v352, 64
        %v358 = vpop.permute.xlu0 %357
        %360 = vrot.lane.b32.xlu0 %v352, 96
        %v361 = vpop.permute.xlu0 %360
        %v363 = vsel %vm346, %v352, %v355
        %v364 = vsel %vm348, %v363, %v358
        %v365 = vsel %vm350, %v364, %v361
        %v366 = vld [vmem:[%s5] sm:$0x1]
        %v367 = vmul.f32 %v329, %v329
        %368 = vadd.xlane.f32.xlu0 %v367
        %v369 = vpop.xlane.xlu0 %368
        %v370 = vrcp.pop 128.0
        %v371 = vmul.f32 %v369, %v370
        %v372 = vadd.f32 %v371, 1e-05
        %v373 = vrsqrt.pop %v372
        %v374 = vmul.f32 %v329, %v373
        %v376 = vlaneseq
        %v377 = vshrl.u32 %v376, 7
        %v378 = vsub.s32 0, %v377
        %v379 = vrot.slane %v366, %v378
        %v381 = vmul.f32 %v374, %v379
        %v382 = vpack.c.bf16 %v381, %v381
        %v383 = vld [vmem:[%s1] sm:$0xff]
        %v384 = vld [vmem:[%s1 + $0x8] sm:$0xff]
        %v385 = vld [vmem:[%s1 + $0x10] sm:$0xff]
        %v386 = vld [vmem:[%s1 + $0x18] sm:$0xff]
        %v387 = vld [vmem:[%s1 + $0x20] sm:$0xff]
        %v388 = vld [vmem:[%s1 + $0x28] sm:$0xff]
        %v389 = vld [vmem:[%s1 + $0x30] sm:$0xff]
        %v390 = vld [vmem:[%s1 + $0x38] sm:$0xff]
        %v391 = vld [vmem:[%s1 + $0x40] sm:$0xff]
        %v392 = vld [vmem:[%s1 + $0x48] sm:$0xff]
        %v393 = vld [vmem:[%s1 + $0x50] sm:$0xff]
        %v394 = vld [vmem:[%s1 + $0x58] sm:$0xff]
        %v395 = vld [vmem:[%s1 + $0x60] sm:$0xff]
        %v396 = vld [vmem:[%s1 + $0x68] sm:$0xff]
        %v397 = vld [vmem:[%s1 + $0x70] sm:$0xff]
        %v398 = vld [vmem:[%s1 + $0x78] sm:$0xff]
        %v399 = vld [vmem:[%s1 + $0x80] sm:$0xff]
        %v400 = vld [vmem:[%s1 + $0x88] sm:$0xff]
        %v401 = vld [vmem:[%s1 + $0x90] sm:$0xff]
        %v402 = vld [vmem:[%s1 + $0x98] sm:$0xff]
        %v403 = vld [vmem:[%s1 + $0xa0] sm:$0xff]
        %v404 = vld [vmem:[%s1 + $0xa8] sm:$0xff]
        %v405 = vld [vmem:[%s1 + $0xb0] sm:$0xff]
        %v406 = vld [vmem:[%s1 + $0xb8] sm:$0xff]
        %v407 = vld [vmem:[%s1 + $0xc0] sm:$0xff]
        %v408 = vld [vmem:[%s1 + $0xc8] sm:$0xff]
        %v409 = vld [vmem:[%s1 + $0xd0] sm:$0xff]
        %v410 = vld [vmem:[%s1 + $0xd8] sm:$0xff]
        %v411 = vld [vmem:[%s1 + $0xe0] sm:$0xff]
        %v412 = vld [vmem:[%s1 + $0xe8] sm:$0xff]
        %v413 = vld [vmem:[%s1 + $0xf0] sm:$0xff]
        %v414 = vld [vmem:[%s1 + $0xf8] sm:$0xff]
        %v447 = vunpack.c.l.b16 %v383
        %v448 = vunpack.c.h.b16 %v383
        %v449 = vunpack.c.l.b16 %v384
        %v450 = vunpack.c.h.b16 %v384
        %v451 = vunpack.c.l.b16 %v385
        %v452 = vunpack.c.h.b16 %v385
        %v453 = vunpack.c.l.b16 %v386
        %v454 = vunpack.c.h.b16 %v386
        %v455 = vunpack.c.l.b16 %v387
        %v456 = vunpack.c.h.b16 %v387
        %v457 = vunpack.c.l.b16 %v388
        %v458 = vunpack.c.h.b16 %v388
        %v459 = vunpack.c.l.b16 %v389
        %v460 = vunpack.c.h.b16 %v389
        %v461 = vunpack.c.l.b16 %v390
        %v462 = vunpack.c.h.b16 %v390
        %v463 = vunpack.c.l.b16 %v391
        %v464 = vunpack.c.h.b16 %v391
        %v465 = vunpack.c.l.b16 %v392
        %v466 = vunpack.c.h.b16 %v392
        %v467 = vunpack.c.l.b16 %v393
        %v468 = vunpack.c.h.b16 %v393
        %v469 = vunpack.c.l.b16 %v394
        %v470 = vunpack.c.h.b16 %v394
        %v471 = vunpack.c.l.b16 %v395
        %v472 = vunpack.c.h.b16 %v395
        %v473 = vunpack.c.l.b16 %v396
        %v474 = vunpack.c.h.b16 %v396
        %v475 = vunpack.c.l.b16 %v397
        %v476 = vunpack.c.h.b16 %v397
        %v477 = vunpack.c.l.b16 %v398
        %v478 = vunpack.c.h.b16 %v398
        %v479 = vunpack.c.l.b16 %v399
        %v480 = vunpack.c.h.b16 %v399
        %v481 = vunpack.c.l.b16 %v400
        %v482 = vunpack.c.h.b16 %v400
        %v483 = vunpack.c.l.b16 %v401
        %v484 = vunpack.c.h.b16 %v401
        %v485 = vunpack.c.l.b16 %v402
        %v486 = vunpack.c.h.b16 %v402
        %v487 = vunpack.c.l.b16 %v403
        %v488 = vunpack.c.h.b16 %v403
        %v489 = vunpack.c.l.b16 %v404
        %v490 = vunpack.c.h.b16 %v404
        %v491 = vunpack.c.l.b16 %v405
        %v492 = vunpack.c.h.b16 %v405
        %v493 = vunpack.c.l.b16 %v406
        %v494 = vunpack.c.h.b16 %v406
        %v495 = vunpack.c.l.b16 %v407
        %v496 = vunpack.c.h.b16 %v407
        %v497 = vunpack.c.l.b16 %v408
        %v498 = vunpack.c.h.b16 %v408
        %v499 = vunpack.c.l.b16 %v409
        %v500 = vunpack.c.h.b16 %v409
        %v501 = vunpack.c.l.b16 %v410
        %v502 = vunpack.c.h.b16 %v410
        %v503 = vunpack.c.l.b16 %v411
        %v504 = vunpack.c.h.b16 %v411
        %v505 = vunpack.c.l.b16 %v412
        %v506 = vunpack.c.h.b16 %v412
        %v507 = vunpack.c.l.b16 %v413
        %v508 = vunpack.c.h.b16 %v413
        %v509 = vunpack.c.l.b16 %v414
        %v510 = vunpack.c.h.b16 %v414
        %v511 = vpack.c.b16 %v451, %v447
        %v512 = vpack.c.b16 %v452, %v448
        %v513 = vpack.c.b16 %v453, %v449
        %v514 = vpack.c.b16 %v454, %v450
        %v515 = vpack.c.b16 %v459, %v455
        %v516 = vpack.c.b16 %v460, %v456
        %v517 = vpack.c.b16 %v461, %v457
        %v518 = vpack.c.b16 %v462, %v458
        %v519 = vpack.c.b16 %v467, %v463
        %v520 = vpack.c.b16 %v468, %v464
        %v521 = vpack.c.b16 %v469, %v465
        %v522 = vpack.c.b16 %v470, %v466
        %v523 = vpack.c.b16 %v475, %v471
        %v524 = vpack.c.b16 %v476, %v472
        %v525 = vpack.c.b16 %v477, %v473
        %v526 = vpack.c.b16 %v478, %v474
        %v527 = vpack.c.b16 %v483, %v479
        %v528 = vpack.c.b16 %v484, %v480
        %v529 = vpack.c.b16 %v485, %v481
        %v530 = vpack.c.b16 %v486, %v482
        %v531 = vpack.c.b16 %v491, %v487
        %v532 = vpack.c.b16 %v492, %v488
        %v533 = vpack.c.b16 %v493, %v489
        %v534 = vpack.c.b16 %v494, %v490
        %v535 = vpack.c.b16 %v499, %v495
        %v536 = vpack.c.b16 %v500, %v496
        %v537 = vpack.c.b16 %v501, %v497
        %v538 = vpack.c.b16 %v502, %v498
        %v539 = vpack.c.b16 %v507, %v503
        %v540 = vpack.c.b16 %v508, %v504
        %v541 = vpack.c.b16 %v509, %v505
        %v542 = vpack.c.b16 %v510, %v506
        %575 = vmatprep.subr.bf16.mxu0 %v540
        %576 = vmatpush1.bf16.msra.mxu0 %v539
        %577 = vmatprep.subr.bf16.mxu0 %v536
        %578 = vmatpush1.bf16.msra.mxu0 %v535
        %579 = vmatprep.subr.bf16.mxu0 %v532
        %580 = vmatpush1.bf16.msra.mxu0 %v531
        %581 = vmatprep.subr.bf16.mxu0 %v528
        %582 = vmatpush1.bf16.msra.mxu0 %v527
        %583 = vmatprep.subr.bf16.mxu0 %v524
        %584 = vmatpush1.bf16.msra.mxu0 %v523
        %585 = vmatprep.subr.bf16.mxu0 %v520
        %586 = vmatpush1.bf16.msra.mxu0 %v519
        %587 = vmatprep.subr.bf16.mxu0 %v516
        %588 = vmatpush1.bf16.msra.mxu0 %v515
        %589 = vmatprep.subr.bf16.mxu0 %v512
        %590 = vmatpush1.bf16.msra.mxu0 %v511
        %591 = vmatprep.subr.bf16.mxu0 0
        %592 = vmatpush2.bf16.msra.mxu0 0
        %593 = vmatprep.subr.bf16.mxu0 0
        %594 = vmatpush2.bf16.msra.mxu0 0
        %595 = vmatprep.subr.bf16.mxu0 0
        %596 = vmatpush2.bf16.msra.mxu0 0
        %597 = vmatprep.subr.bf16.mxu0 0
        %598 = vmatpush2.bf16.msra.mxu0 0
        %599 = vmatprep.subr.bf16.mxu0 0
        %600 = vmatpush2.bf16.msra.mxu0 0
        %601 = vmatprep.subr.bf16.mxu0 0
        %602 = vmatpush2.bf16.msra.mxu0 0
        %603 = vmatprep.subr.bf16.mxu0 0
        %604 = vmatpush2.bf16.msra.mxu0 0
        %605 = vmatprep.subr.bf16.mxu0 0
        %606 = vmatpush2.bf16.msra.mxu0 0
        %607 = vmatprep.mubr.bf16.mxu0 0
        %608 = vmatmul.mubr.bf16.gmra.mxu0 %v382
        %v609 = vpop.f32.mrf.mxu0
        %v610 = vadd.f32 0.0, %v609
        %v611 = vpop.f32.mrf.mxu0
        %v612 = vadd.f32 0.0, %v611
        %v613 = vpop.f32.mrf.mxu0
        %v614 = vpop.f32.mrf.mxu0
        %615 = vdwg.mxu0
        %616 = vmatprep.subr.bf16.mxu0 %v542
        %617 = vmatpush1.bf16.msra.mxu0 %v541
        %618 = vmatprep.subr.bf16.mxu0 %v538
        %619 = vmatpush1.bf16.msra.mxu0 %v537
        %620 = vmatprep.subr.bf16.mxu0 %v534
        %621 = vmatpush1.bf16.msra.mxu0 %v533
        %622 = vmatprep.subr.bf16.mxu0 %v530
        %623 = vmatpush1.bf16.msra.mxu0 %v529
        %624 = vmatprep.subr.bf16.mxu0 %v526
        %625 = vmatpush1.bf16.msra.mxu0 %v525
        %626 = vmatprep.subr.bf16.mxu0 %v522
        %627 = vmatpush1.bf16.msra.mxu0 %v521
        %628 = vmatprep.subr.bf16.mxu0 %v518
        %629 = vmatpush1.bf16.msra.mxu0 %v517
        %630 = vmatprep.subr.bf16.mxu0 %v514
        %631 = vmatpush1.bf16.msra.mxu0 %v513
        %632 = vmatprep.subr.bf16.mxu0 0
        %633 = vmatpush2.bf16.msra.mxu0 0
        %634 = vmatprep.subr.bf16.mxu0 0
        %635 = vmatpush2.bf16.msra.mxu0 0
        %636 = vmatprep.subr.bf16.mxu0 0
        %637 = vmatpush2.bf16.msra.mxu0 0
        %638 = vmatprep.subr.bf16.mxu0 0
        %639 = vmatpush2.bf16.msra.mxu0 0
        %640 = vmatprep.subr.bf16.mxu0 0
        %641 = vmatpush2.bf16.msra.mxu0 0
        %642 = vmatprep.subr.bf16.mxu0 0
        %643 = vmatpush2.bf16.msra.mxu0 0
        %644 = vmatprep.subr.bf16.mxu0 0
        %645 = vmatpush2.bf16.msra.mxu0 0
        %646 = vmatprep.subr.bf16.mxu0 0
        %647 = vmatpush2.bf16.msra.mxu0 0
        %648 = vmatprep.mubr.bf16.mxu0 0
        %649 = vmatmul.mubr.bf16.gmra.mxu0 %v382
        %v650 = vpop.f32.mrf.mxu0
        %v651 = vadd.f32 0.0, %v650
        %v652 = vpop.f32.mrf.mxu0
        %v653 = vadd.f32 0.0, %v652
        %v654 = vpop.f32.mrf.mxu0
        %v655 = vpop.f32.mrf.mxu0
        %656 = vdwg.mxu0
        %v657 = vmul.f32 %v610, %v351
        %v658 = vmul.f32 %v612, %v365
        %v659 = vadd.f32 %v657, %v658
        %v660 = vmul.f32 %v651, %v351
        %662 = vrot.lane.b32.xlu0 %v365, 64
        %v663 = vpop.permute.xlu0 %662
        %v665 = vmul.f32 %v651, %v663
        %667 = vrot.lane.b32.xlu0 %v665, 64
        %v668 = vpop.permute.xlu0 %667
        %v670 = vadd.f32 %v660, %v668
        %v671 = vpack.c.bf16 %v659, %v659
        %v672 = vpack.c.bf16 %v670, %v670
        %v674 = vsel %vm346, %v671, 0
        %v677 = vsel %vm346, %v672, 0
        %679 = vmatprep.subr.bf16.mxu0 0
        %680 = vmatpush1.bf16.xpose.msra.mxu0 0
        %681 = vmatprep.subr.bf16.mxu0 0
        %682 = vmatpush1.bf16.xpose.msra.mxu0 0
        %683 = vmatprep.subr.bf16.mxu0 0
        %684 = vmatpush1.bf16.xpose.msra.mxu0 0
        %685 = vmatprep.subr.bf16.mxu0 0
        %686 = vmatpush1.bf16.xpose.msra.mxu0 0
        %687 = vmatprep.subr.bf16.mxu0 0
        %688 = vmatpush1.bf16.xpose.msra.mxu0 0
        %689 = vmatprep.subr.bf16.mxu0 0
        %690 = vmatpush1.bf16.xpose.msra.mxu0 0
        %691 = vmatprep.subr.bf16.mxu0 0
        %692 = vmatpush1.bf16.xpose.msra.mxu0 0
        %693 = vmatprep.subr.bf16.mxu0 0
        %694 = vmatpush1.bf16.xpose.msra.mxu0 %v677
        %695 = vmatprep.subr.bf16.mxu0 0
        %696 = vmatpush2.bf16.xpose.msra.mxu0 0
        %697 = vmatprep.subr.bf16.mxu0 0
        %698 = vmatpush2.bf16.xpose.msra.mxu0 0
        %699 = vmatprep.subr.bf16.mxu0 0
        %700 = vmatpush2.bf16.xpose.msra.mxu0 0
        %701 = vmatprep.subr.bf16.mxu0 0
        %702 = vmatpush2.bf16.xpose.msra.mxu0 0
        %703 = vmatprep.subr.bf16.mxu0 0
        %704 = vmatpush2.bf16.xpose.msra.mxu0 0
        %705 = vmatprep.subr.bf16.mxu0 0
        %706 = vmatpush2.bf16.xpose.msra.mxu0 0
        %707 = vmatprep.subr.bf16.mxu0 0
        %708 = vmatpush2.bf16.xpose.msra.mxu0 0
        %709 = vmatprep.subr.bf16.mxu0 0
        %710 = vmatpush2.bf16.xpose.msra.mxu0 0
        %711 = vmatprep.mubr.bf16.mxu0 0
        %712 = vmatmul.mubr.bf16.gmra.mxu0 %v674
        %v713 = vpop.f32.mrf.mxu0
        %v714 = vadd.f32 0.0, %v713
        %v715 = vpop.f32.mrf.mxu0
        %v716 = vpop.f32.mrf.mxu0
        %v717 = vpop.f32.mrf.mxu0
        %718 = vdwg.mxu0
        %v719 = vsel %vm334, %v714, -1e+30
        %vm720 = vcmask 64512
        %v721 = vsel %vm720, %v719, -inf
        %722 = vmax.xlane.f32.xlu0 %v721
        %v723 = vpop.xlane.xlu0 %722
        %v724 = vsub.f32 %v719, %v723
        %v725 = vmul.f32 %v724, 1.442695
        %v726 = vpow.pop %v725
        %v727 = vsel %vm720, %v726, 0.0
        %728 = vadd.xlane.f32.xlu0 %v727
        %v729 = vpop.xlane.xlu0 %728
        %v730 = vrcp.pop %v729
        %v731 = vmul.f32 %v726, %v730
        %v732 = vpack.c.bf16 %v731, %v731
        %v733 = vpack.c.bf16 %v653, %v653
        %v735 = vsel %vm720, %v732, 0
        %vm737 = vcmask 1043456
        %v739 = vsel %vm737, %v733, 0
        %741 = vmatprep.subr.bf16.mxu0 0
        %742 = vmatpush1.bf16.msra.mxu0 0
        %743 = vmatprep.subr.bf16.mxu0 0
        %744 = vmatpush1.bf16.msra.mxu0 0
        %745 = vmatprep.subr.bf16.mxu0 0
        %746 = vmatpush1.bf16.msra.mxu0 0
        %747 = vmatprep.subr.bf16.mxu0 0
        %748 = vmatpush1.bf16.msra.mxu0 0
        %749 = vmatprep.subr.bf16.mxu0 0
        %750 = vmatpush1.bf16.msra.mxu0 0
        %751 = vmatprep.subr.bf16.mxu0 0
        %752 = vmatpush1.bf16.msra.mxu0 0
        %753 = vmatprep.subr.bf16.mxu0 0
        %754 = vmatpush1.bf16.msra.mxu0 0
        %755 = vmatprep.subr.bf16.mxu0 0
        %756 = vmatpush1.bf16.msra.mxu0 %v739
        %757 = vmatprep.subr.bf16.mxu0 0
        %758 = vmatpush2.bf16.msra.mxu0 0
        %759 = vmatprep.subr.bf16.mxu0 0
        %760 = vmatpush2.bf16.msra.mxu0 0
        %761 = vmatprep.subr.bf16.mxu0 0
        %762 = vmatpush2.bf16.msra.mxu0 0
        %763 = vmatprep.subr.bf16.mxu0 0
        %764 = vmatpush2.bf16.msra.mxu0 0
        %765 = vmatprep.subr.bf16.mxu0 0
        %766 = vmatpush2.bf16.msra.mxu0 0
        %767 = vmatprep.subr.bf16.mxu0 0
        %768 = vmatpush2.bf16.msra.mxu0 0
        %769 = vmatprep.subr.bf16.mxu0 0
        %770 = vmatpush2.bf16.msra.mxu0 0
        %771 = vmatprep.subr.bf16.mxu0 0
        %772 = vmatpush2.bf16.msra.mxu0 0
        %773 = vmatprep.mubr.bf16.mxu0 0
        %774 = vmatmul.mubr.bf16.gmra.mxu0 %v735
        %v775 = vpop.f32.mrf.mxu0
        %v776 = vadd.f32 0.0, %v775
        %v777 = vpop.f32.mrf.mxu0
        %v778 = vpop.f32.mrf.mxu0
        %v779 = vpop.f32.mrf.mxu0
        %780 = vdwg.mxu0
        %781 = vst.msk [vmem:[#allocation2] sm:$0xff] %vm346, %v776
        %783 = vrot.lane.b32.xlu0 %v671, 96
        %v784 = vpop.permute.xlu0 %783
        %v786 = vsel %vm346, %v784, 0
        %788 = vmatprep.subr.bf16.mxu0 0
        %789 = vmatpush1.bf16.xpose.msra.mxu0 0
        %790 = vmatprep.subr.bf16.mxu0 0
        %791 = vmatpush1.bf16.xpose.msra.mxu0 0
        %792 = vmatprep.subr.bf16.mxu0 0
        %793 = vmatpush1.bf16.xpose.msra.mxu0 0
        %794 = vmatprep.subr.bf16.mxu0 0
        %795 = vmatpush1.bf16.xpose.msra.mxu0 0
        %796 = vmatprep.subr.bf16.mxu0 0
        %797 = vmatpush1.bf16.xpose.msra.mxu0 0
        %798 = vmatprep.subr.bf16.mxu0 0
        %799 = vmatpush1.bf16.xpose.msra.mxu0 0
        %800 = vmatprep.subr.bf16.mxu0 0
        %801 = vmatpush1.bf16.xpose.msra.mxu0 0
        %802 = vmatprep.subr.bf16.mxu0 0
        %803 = vmatpush1.bf16.xpose.msra.mxu0 %v677
        %804 = vmatprep.subr.bf16.mxu0 0
        %805 = vmatpush2.bf16.xpose.msra.mxu0 0
        %806 = vmatprep.subr.bf16.mxu0 0
        %807 = vmatpush2.bf16.xpose.msra.mxu0 0
        %808 = vmatprep.subr.bf16.mxu0 0
        %809 = vmatpush2.bf16.xpose.msra.mxu0 0
        %810 = vmatprep.subr.bf16.mxu0 0
        %811 = vmatpush2.bf16.xpose.msra.mxu0 0
        %812 = vmatprep.subr.bf16.mxu0 0
        %813 = vmatpush2.bf16.xpose.msra.mxu0 0
        %814 = vmatprep.subr.bf16.mxu0 0
        %815 = vmatpush2.bf16.xpose.msra.mxu0 0
        %816 = vmatprep.subr.bf16.mxu0 0
        %817 = vmatpush2.bf16.xpose.msra.mxu0 0
        %818 = vmatprep.subr.bf16.mxu0 0
        %819 = vmatpush2.bf16.xpose.msra.mxu0 0
        %820 = vmatprep.mubr.bf16.mxu0 0
        %821 = vmatmul.mubr.bf16.gmra.mxu0 %v786
        %v822 = vpop.f32.mrf.mxu0
        %v823 = vadd.f32 0.0, %v822
        %v824 = vpop.f32.mrf.mxu0
        %v825 = vpop.f32.mrf.mxu0
        %v826 = vpop.f32.mrf.mxu0
        %827 = vdwg.mxu0
        %v828 = vsel %vm334, %v823, -1e+30
        %v829 = vsel %vm720, %v828, -inf
        %830 = vmax.xlane.f32.xlu0 %v829
        %v831 = vpop.xlane.xlu0 %830
        %v832 = vsub.f32 %v828, %v831
        %v833 = vmul.f32 %v832, 1.442695
        %v834 = vpow.pop %v833
        %v835 = vsel %vm720, %v834, 0.0
        %836 = vadd.xlane.f32.xlu0 %v835
        %v837 = vpop.xlane.xlu0 %836
        %v838 = vrcp.pop %v837
        %v839 = vmul.f32 %v834, %v838
        %v840 = vpack.c.bf16 %v839, %v839
        %v842 = vsel %vm720, %v840, 0
        %844 = vmatprep.subr.bf16.mxu0 0
        %845 = vmatpush1.bf16.msra.mxu0 0
        %846 = vmatprep.subr.bf16.mxu0 0
        %847 = vmatpush1.bf16.msra.mxu0 0
        %848 = vmatprep.subr.bf16.mxu0 0
        %849 = vmatpush1.bf16.msra.mxu0 0
        %850 = vmatprep.subr.bf16.mxu0 0
        %851 = vmatpush1.bf16.msra.mxu0 0
        %852 = vmatprep.subr.bf16.mxu0 0
        %853 = vmatpush1.bf16.msra.mxu0 0
        %854 = vmatprep.subr.bf16.mxu0 0
        %855 = vmatpush1.bf16.msra.mxu0 0
        %856 = vmatprep.subr.bf16.mxu0 0
        %857 = vmatpush1.bf16.msra.mxu0 0
        %858 = vmatprep.subr.bf16.mxu0 0
        %859 = vmatpush1.bf16.msra.mxu0 %v739
        %860 = vmatprep.subr.bf16.mxu0 0
        %861 = vmatpush2.bf16.msra.mxu0 0
        %862 = vmatprep.subr.bf16.mxu0 0
        %863 = vmatpush2.bf16.msra.mxu0 0
        %864 = vmatprep.subr.bf16.mxu0 0
        %865 = vmatpush2.bf16.msra.mxu0 0
        %866 = vmatprep.subr.bf16.mxu0 0
        %867 = vmatpush2.bf16.msra.mxu0 0
        %868 = vmatprep.subr.bf16.mxu0 0
        %869 = vmatpush2.bf16.msra.mxu0 0
        %870 = vmatprep.subr.bf16.mxu0 0
        %871 = vmatpush2.bf16.msra.mxu0 0
        %872 = vmatprep.subr.bf16.mxu0 0
        %873 = vmatpush2.bf16.msra.mxu0 0
        %874 = vmatprep.subr.bf16.mxu0 0
        %875 = vmatpush2.bf16.msra.mxu0 0
        %876 = vmatprep.mubr.bf16.mxu0 0
        %877 = vmatmul.mubr.bf16.gmra.mxu0 %v842
        %v878 = vpop.f32.mrf.mxu0
        %v879 = vadd.f32 0.0, %v878
        %v880 = vpop.f32.mrf.mxu0
        %v881 = vpop.f32.mrf.mxu0
        %v882 = vpop.f32.mrf.mxu0
        %883 = vdwg.mxu0
        %885 = vrot.lane.b32.xlu0 %v879, 32
        %v886 = vpop.permute.xlu0 %885
        %vm888 = vcmask 523520
        %889 = vst.msk [vmem:[#allocation2] sm:$0xff] %vm888, %v886
        %890 = vrot.lane.b32.xlu0 %v671, 64
        %v891 = vpop.permute.xlu0 %890
        %893 = vrot.lane.b32.xlu0 %v672, 96
        %v894 = vpop.permute.xlu0 %893
        %v896 = vsel %vm346, %v891, 0
        %v899 = vsel %vm346, %v894, 0
        %901 = vmatprep.subr.bf16.mxu0 0
        %902 = vmatpush1.bf16.xpose.msra.mxu0 0
        %903 = vmatprep.subr.bf16.mxu0 0
        %904 = vmatpush1.bf16.xpose.msra.mxu0 0
        %905 = vmatprep.subr.bf16.mxu0 0
        %906 = vmatpush1.bf16.xpose.msra.mxu0 0
        %907 = vmatprep.subr.bf16.mxu0 0
        %908 = vmatpush1.bf16.xpose.msra.mxu0 0
        %909 = vmatprep.subr.bf16.mxu0 0
        %910 = vmatpush1.bf16.xpose.msra.mxu0 0
        %911 = vmatprep.subr.bf16.mxu0 0
        %912 = vmatpush1.bf16.xpose.msra.mxu0 0
        %913 = vmatprep.subr.bf16.mxu0 0
        %914 = vmatpush1.bf16.xpose.msra.mxu0 0
        %915 = vmatprep.subr.bf16.mxu0 0
        %916 = vmatpush1.bf16.xpose.msra.mxu0 %v899
        %917 = vmatprep.subr.bf16.mxu0 0
        %918 = vmatpush2.bf16.xpose.msra.mxu0 0
        %919 = vmatprep.subr.bf16.mxu0 0
        %920 = vmatpush2.bf16.xpose.msra.mxu0 0
        %921 = vmatprep.subr.bf16.mxu0 0
        %922 = vmatpush2.bf16.xpose.msra.mxu0 0
        %923 = vmatprep.subr.bf16.mxu0 0
        %924 = vmatpush2.bf16.xpose.msra.mxu0 0
        %925 = vmatprep.subr.bf16.mxu0 0
        %926 = vmatpush2.bf16.xpose.msra.mxu0 0
        %927 = vmatprep.subr.bf16.mxu0 0
        %928 = vmatpush2.bf16.xpose.msra.mxu0 0
        %929 = vmatprep.subr.bf16.mxu0 0
        %930 = vmatpush2.bf16.xpose.msra.mxu0 0
        %931 = vmatprep.subr.bf16.mxu0 0
        %932 = vmatpush2.bf16.xpose.msra.mxu0 0
        %933 = vmatprep.mubr.bf16.mxu0 0
        %934 = vmatmul.mubr.bf16.gmra.mxu0 %v896
        %v935 = vpop.f32.mrf.mxu0
        %v936 = vadd.f32 0.0, %v935
        %v937 = vpop.f32.mrf.mxu0
        %v938 = vpop.f32.mrf.mxu0
        %v939 = vpop.f32.mrf.mxu0
        %940 = vdwg.mxu0
        %v941 = vsel %vm334, %v936, -1e+30
        %v942 = vsel %vm720, %v941, -inf
        %943 = vmax.xlane.f32.xlu0 %v942
        %v944 = vpop.xlane.xlu0 %943
        %v945 = vsub.f32 %v941, %v944
        %v946 = vmul.f32 %v945, 1.442695
        %v947 = vpow.pop %v946
        %v948 = vsel %vm720, %v947, 0.0
        %949 = vadd.xlane.f32.xlu0 %v948
        %v950 = vpop.xlane.xlu0 %949
        %v951 = vrcp.pop %v950
        %v952 = vmul.f32 %v947, %v951
        %v953 = vpack.c.bf16 %v952, %v952
        %955 = vrot.lane.b32.xlu0 %v733, 96
        %v956 = vpop.permute.xlu0 %955
        %v958 = vsel %vm720, %v953, 0
        %v961 = vsel %vm737, %v956, 0
        %963 = vmatprep.subr.bf16.mxu0 0
        %964 = vmatpush1.bf16.msra.mxu0 0
        %965 = vmatprep.subr.bf16.mxu0 0
        %966 = vmatpush1.bf16.msra.mxu0 0
        %967 = vmatprep.subr.bf16.mxu0 0
        %968 = vmatpush1.bf16.msra.mxu0 0
        %969 = vmatprep.subr.bf16.mxu0 0
        %970 = vmatpush1.bf16.msra.mxu0 0
        %971 = vmatprep.subr.bf16.mxu0 0
        %972 = vmatpush1.bf16.msra.mxu0 0
        %973 = vmatprep.subr.bf16.mxu0 0
        %974 = vmatpush1.bf16.msra.mxu0 0
        %975 = vmatprep.subr.bf16.mxu0 0
        %976 = vmatpush1.bf16.msra.mxu0 0
        %977 = vmatprep.subr.bf16.mxu0 0
        %978 = vmatpush1.bf16.msra.mxu0 %v961
        %979 = vmatprep.subr.bf16.mxu0 0
        %980 = vmatpush2.bf16.msra.mxu0 0
        %981 = vmatprep.subr.bf16.mxu0 0
        %982 = vmatpush2.bf16.msra.mxu0 0
        %983 = vmatprep.subr.bf16.mxu0 0
        %984 = vmatpush2.bf16.msra.mxu0 0
        %985 = vmatprep.subr.bf16.mxu0 0
        %986 = vmatpush2.bf16.msra.mxu0 0
        %987 = vmatprep.subr.bf16.mxu0 0
        %988 = vmatpush2.bf16.msra.mxu0 0
        %989 = vmatprep.subr.bf16.mxu0 0
        %990 = vmatpush2.bf16.msra.mxu0 0
        %991 = vmatprep.subr.bf16.mxu0 0
        %992 = vmatpush2.bf16.msra.mxu0 0
        %993 = vmatprep.subr.bf16.mxu0 0
        %994 = vmatpush2.bf16.msra.mxu0 0
        %995 = vmatprep.mubr.bf16.mxu0 0
        %996 = vmatmul.mubr.bf16.gmra.mxu0 %v958
        %v997 = vpop.f32.mrf.mxu0
        %v998 = vadd.f32 0.0, %v997
        %v999 = vpop.f32.mrf.mxu0
        %v1000 = vpop.f32.mrf.mxu0
        %v1001 = vpop.f32.mrf.mxu0
        %1002 = vdwg.mxu0
        %1004 = vrot.lane.b32.xlu0 %v998, 64
        %v1005 = vpop.permute.xlu0 %1004
        %vm1007 = vcmask 785920
        %1008 = vst.msk [vmem:[#allocation2] sm:$0xff] %vm1007, %v1005
        %1009 = vrot.lane.b32.xlu0 %v671, 32
        %v1010 = vpop.permute.xlu0 %1009
        %v1012 = vsel %vm346, %v1010, 0
        %1014 = vmatprep.subr.bf16.mxu0 0
        %1015 = vmatpush1.bf16.xpose.msra.mxu0 0
        %1016 = vmatprep.subr.bf16.mxu0 0
        %1017 = vmatpush1.bf16.xpose.msra.mxu0 0
        %1018 = vmatprep.subr.bf16.mxu0 0
        %1019 = vmatpush1.bf16.xpose.msra.mxu0 0
        %1020 = vmatprep.subr.bf16.mxu0 0
        %1021 = vmatpush1.bf16.xpose.msra.mxu0 0
        %1022 = vmatprep.subr.bf16.mxu0 0
        %1023 = vmatpush1.bf16.xpose.msra.mxu0 0
        %1024 = vmatprep.subr.bf16.mxu0 0
        %1025 = vmatpush1.bf16.xpose.msra.mxu0 0
        %1026 = vmatprep.subr.bf16.mxu0 0
        %1027 = vmatpush1.bf16.xpose.msra.mxu0 0
        %1028 = vmatprep.subr.bf16.mxu0 0
        %1029 = vmatpush1.bf16.xpose.msra.mxu0 %v899
        %1030 = vmatprep.subr.bf16.mxu0 0
        %1031 = vmatpush2.bf16.xpose.msra.mxu0 0
        %1032 = vmatprep.subr.bf16.mxu0 0
        %1033 = vmatpush2.bf16.xpose.msra.mxu0 0
        %1034 = vmatprep.subr.bf16.mxu0 0
        %1035 = vmatpush2.bf16.xpose.msra.mxu0 0
        %1036 = vmatprep.subr.bf16.mxu0 0
        %1037 = vmatpush2.bf16.xpose.msra.mxu0 0
        %1038 = vmatprep.subr.bf16.mxu0 0
        %1039 = vmatpush2.bf16.xpose.msra.mxu0 0
        %1040 = vmatprep.subr.bf16.mxu0 0
        %1041 = vmatpush2.bf16.xpose.msra.mxu0 0
        %1042 = vmatprep.subr.bf16.mxu0 0
        %1043 = vmatpush2.bf16.xpose.msra.mxu0 0
        %1044 = vmatprep.subr.bf16.mxu0 0
        %1045 = vmatpush2.bf16.xpose.msra.mxu0 0
        %1046 = vmatprep.mubr.bf16.mxu0 0
        %1047 = vmatmul.mubr.bf16.gmra.mxu0 %v1012
        %v1048 = vpop.f32.mrf.mxu0
        %v1049 = vadd.f32 0.0, %v1048
        %v1050 = vpop.f32.mrf.mxu0
        %v1051 = vpop.f32.mrf.mxu0
        %v1052 = vpop.f32.mrf.mxu0
        %1053 = vdwg.mxu0
        %v1054 = vsel %vm334, %v1049, -1e+30
        %v1055 = vsel %vm720, %v1054, -inf
        %1056 = vmax.xlane.f32.xlu0 %v1055
        %v1057 = vpop.xlane.xlu0 %1056
        %v1058 = vsub.f32 %v1054, %v1057
        %v1059 = vmul.f32 %v1058, 1.442695
        %v1060 = vpow.pop %v1059
        %v1061 = vsel %vm720, %v1060, 0.0
        %1062 = vadd.xlane.f32.xlu0 %v1061
        %v1063 = vpop.xlane.xlu0 %1062
        %v1064 = vrcp.pop %v1063
        %v1065 = vmul.f32 %v1060, %v1064
        %v1066 = vpack.c.bf16 %v1065, %v1065
        %v1068 = vsel %vm720, %v1066, 0
        %1070 = vmatprep.subr.bf16.mxu0 0
        %1071 = vmatpush1.bf16.msra.mxu0 0
        %1072 = vmatprep.subr.bf16.mxu0 0
        %1073 = vmatpush1.bf16.msra.mxu0 0
        %1074 = vmatprep.subr.bf16.mxu0 0
        %1075 = vmatpush1.bf16.msra.mxu0 0
        %1076 = vmatprep.subr.bf16.mxu0 0
        %1077 = vmatpush1.bf16.msra.mxu0 0
        %1078 = vmatprep.subr.bf16.mxu0 0
        %1079 = vmatpush1.bf16.msra.mxu0 0
        %1080 = vmatprep.subr.bf16.mxu0 0
        %1081 = vmatpush1.bf16.msra.mxu0 0
        %1082 = vmatprep.subr.bf16.mxu0 0
        %1083 = vmatpush1.bf16.msra.mxu0 0
        %1084 = vmatprep.subr.bf16.mxu0 0
        %1085 = vmatpush1.bf16.msra.mxu0 %v961
        %1086 = vmatprep.subr.bf16.mxu0 0
        %1087 = vmatpush2.bf16.msra.mxu0 0
        %1088 = vmatprep.subr.bf16.mxu0 0
        %1089 = vmatpush2.bf16.msra.mxu0 0
        %1090 = vmatprep.subr.bf16.mxu0 0
        %1091 = vmatpush2.bf16.msra.mxu0 0
        %1092 = vmatprep.subr.bf16.mxu0 0
        %1093 = vmatpush2.bf16.msra.mxu0 0
        %1094 = vmatprep.subr.bf16.mxu0 0
        %1095 = vmatpush2.bf16.msra.mxu0 0
        %1096 = vmatprep.subr.bf16.mxu0 0
        %1097 = vmatpush2.bf16.msra.mxu0 0
        %1098 = vmatprep.subr.bf16.mxu0 0
        %1099 = vmatpush2.bf16.msra.mxu0 0
        %1100 = vmatprep.subr.bf16.mxu0 0
        %1101 = vmatpush2.bf16.msra.mxu0 0
        %1102 = vmatprep.mubr.bf16.mxu0 0
        %1103 = vmatmul.mubr.bf16.gmra.mxu0 %v1068
        %v1104 = vpop.f32.mrf.mxu0
        %v1105 = vadd.f32 0.0, %v1104
        %v1106 = vpop.f32.mrf.mxu0
        %v1107 = vpop.f32.mrf.mxu0
        %v1108 = vpop.f32.mrf.mxu0
        %1109 = vdwg.mxu0
        %1111 = vrot.lane.b32.xlu0 %v1105, 96
        %v1112 = vpop.permute.xlu0 %1111
        %vm1114 = vcmask 1048320
        %1115 = vst.msk [vmem:[#allocation2] sm:$0xff] %vm1114, %v1112
        %v1116 = vld [vmem:[#allocation2] sm:$0xff]
        %v1117 = vpack.c.bf16 %v1116, %v1116
        %v1118 = vld [vmem:[%s2] sm:$0xf]
        %v1119 = vld [vmem:[%s2 + $0x4] sm:$0xf]
        %v1120 = vld [vmem:[%s2 + $0x8] sm:$0xf]
        %v1121 = vld [vmem:[%s2 + $0xc] sm:$0xf]
        %v1122 = vld [vmem:[%s2 + $0x10] sm:$0xf]
        %v1123 = vld [vmem:[%s2 + $0x14] sm:$0xf]
        %v1124 = vld [vmem:[%s2 + $0x18] sm:$0xf]
        %v1125 = vld [vmem:[%s2 + $0x1c] sm:$0xf]
        %v1126 = vld [vmem:[%s2 + $0x20] sm:$0xf]
        %v1127 = vld [vmem:[%s2 + $0x24] sm:$0xf]
        %v1128 = vld [vmem:[%s2 + $0x28] sm:$0xf]
        %v1129 = vld [vmem:[%s2 + $0x2c] sm:$0xf]
        %v1130 = vld [vmem:[%s2 + $0x30] sm:$0xf]
        %v1131 = vld [vmem:[%s2 + $0x34] sm:$0xf]
        %v1132 = vld [vmem:[%s2 + $0x38] sm:$0xf]
        %v1133 = vld [vmem:[%s2 + $0x3c] sm:$0xf]
        %v1150 = vunpack.c.l.b16 %v1118
        %v1151 = vunpack.c.l.b16 %v1119
        %v1152 = vunpack.c.l.b16 %v1120
        %v1153 = vunpack.c.l.b16 %v1121
        %v1154 = vunpack.c.l.b16 %v1122
        %v1155 = vunpack.c.l.b16 %v1123
        %v1156 = vunpack.c.l.b16 %v1124
        %v1157 = vunpack.c.l.b16 %v1125
        %v1158 = vunpack.c.l.b16 %v1126
        %v1159 = vunpack.c.l.b16 %v1127
        %v1160 = vunpack.c.l.b16 %v1128
        %v1161 = vunpack.c.l.b16 %v1129
        %v1162 = vunpack.c.l.b16 %v1130
        %v1163 = vunpack.c.l.b16 %v1131
        %v1164 = vunpack.c.l.b16 %v1132
        %v1165 = vunpack.c.l.b16 %v1133
        %v1166 = vpack.c.b16 %v1151, %v1150
        %v1167 = vpack.c.b16 %v1153, %v1152
        %v1168 = vpack.c.b16 %v1155, %v1154
        %v1169 = vpack.c.b16 %v1157, %v1156
        %v1170 = vpack.c.b16 %v1159, %v1158
        %v1171 = vpack.c.b16 %v1161, %v1160
        %v1172 = vpack.c.b16 %v1163, %v1162
        %v1173 = vpack.c.b16 %v1165, %v1164
        %1182 = vmatprep.subr.bf16.mxu0 0
        %1183 = vmatpush1.bf16.msra.mxu0 %v1173
        %1184 = vmatprep.subr.bf16.mxu0 0
        %1185 = vmatpush1.bf16.msra.mxu0 %v1172
        %1186 = vmatprep.subr.bf16.mxu0 0
        %1187 = vmatpush1.bf16.msra.mxu0 %v1171
        %1188 = vmatprep.subr.bf16.mxu0 0
        %1189 = vmatpush1.bf16.msra.mxu0 %v1170
        %1190 = vmatprep.subr.bf16.mxu0 0
        %1191 = vmatpush1.bf16.msra.mxu0 %v1169
        %1192 = vmatprep.subr.bf16.mxu0 0
        %1193 = vmatpush1.bf16.msra.mxu0 %v1168
        %1194 = vmatprep.subr.bf16.mxu0 0
        %1195 = vmatpush1.bf16.msra.mxu0 %v1167
        %1196 = vmatprep.subr.bf16.mxu0 0
        %1197 = vmatpush1.bf16.msra.mxu0 %v1166
        %1198 = vmatprep.subr.bf16.mxu0 0
        %1199 = vmatpush2.bf16.msra.mxu0 0
        %1200 = vmatprep.subr.bf16.mxu0 0
        %1201 = vmatpush2.bf16.msra.mxu0 0
        %1202 = vmatprep.subr.bf16.mxu0 0
        %1203 = vmatpush2.bf16.msra.mxu0 0
        %1204 = vmatprep.subr.bf16.mxu0 0
        %1205 = vmatpush2.bf16.msra.mxu0 0
        %1206 = vmatprep.subr.bf16.mxu0 0
        %1207 = vmatpush2.bf16.msra.mxu0 0
        %1208 = vmatprep.subr.bf16.mxu0 0
        %1209 = vmatpush2.bf16.msra.mxu0 0
        %1210 = vmatprep.subr.bf16.mxu0 0
        %1211 = vmatpush2.bf16.msra.mxu0 0
        %1212 = vmatprep.subr.bf16.mxu0 0
        %1213 = vmatpush2.bf16.msra.mxu0 0
        %1214 = vmatprep.mubr.bf16.mxu0 0
        %1215 = vmatmul.mubr.bf16.gmra.mxu0 %v1117
        %v1216 = vpop.f32.mrf.mxu0
        %v1217 = vadd.f32 0.0, %v1216
        %v1218 = vpop.f32.mrf.mxu0
        %v1219 = vpop.f32.mrf.mxu0
        %v1220 = vpop.f32.mrf.mxu0
        %1221 = vdwg.mxu0
        %v1222 = vadd.f32 %v329, %v1217
        %v1223 = vld [vmem:[%s6] sm:$0x1]
        %v1224 = vmul.f32 %v1222, %v1222
        %1225 = vadd.xlane.f32.xlu0 %v1224
        %v1226 = vpop.xlane.xlu0 %1225
        %v1227 = vmul.f32 %v1226, %v370
        %v1228 = vadd.f32 %v1227, 1e-05
        %v1229 = vrsqrt.pop %v1228
        %v1230 = vmul.f32 %v1222, %v1229
        %v1232 = vlaneseq
        %v1233 = vshrl.u32 %v1232, 7
        %v1234 = vsub.s32 0, %v1233
        %v1235 = vrot.slane %v1223, %v1234
        %v1237 = vmul.f32 %v1230, %v1235
        %v1238 = vpack.c.bf16 %v1237, %v1237
        %v1239 = vld [vmem:[%s3] sm:$0xff]
        %v1240 = vld [vmem:[%s3 + $0x8] sm:$0xff]
        %v1241 = vld [vmem:[%s3 + $0x10] sm:$0xff]
        %v1242 = vld [vmem:[%s3 + $0x18] sm:$0xff]
        %v1243 = vld [vmem:[%s3 + $0x20] sm:$0xff]
        %v1244 = vld [vmem:[%s3 + $0x28] sm:$0xff]
        %v1245 = vld [vmem:[%s3 + $0x30] sm:$0xff]
        %v1246 = vld [vmem:[%s3 + $0x38] sm:$0xff]
        %v1247 = vld [vmem:[%s3 + $0x40] sm:$0xff]
        %v1248 = vld [vmem:[%s3 + $0x48] sm:$0xff]
        %v1249 = vld [vmem:[%s3 + $0x50] sm:$0xff]
        %v1250 = vld [vmem:[%s3 + $0x58] sm:$0xff]
        %v1251 = vld [vmem:[%s3 + $0x60] sm:$0xff]
        %v1252 = vld [vmem:[%s3 + $0x68] sm:$0xff]
        %v1253 = vld [vmem:[%s3 + $0x70] sm:$0xff]
        %v1254 = vld [vmem:[%s3 + $0x78] sm:$0xff]
        %v1255 = vld [vmem:[%s3 + $0x80] sm:$0xff]
        %v1256 = vld [vmem:[%s3 + $0x88] sm:$0xff]
        %v1257 = vld [vmem:[%s3 + $0x90] sm:$0xff]
        %v1258 = vld [vmem:[%s3 + $0x98] sm:$0xff]
        %v1259 = vld [vmem:[%s3 + $0xa0] sm:$0xff]
        %v1260 = vld [vmem:[%s3 + $0xa8] sm:$0xff]
        %v1261 = vld [vmem:[%s3 + $0xb0] sm:$0xff]
        %v1262 = vld [vmem:[%s3 + $0xb8] sm:$0xff]
        %v1263 = vld [vmem:[%s3 + $0xc0] sm:$0xff]
        %v1264 = vld [vmem:[%s3 + $0xc8] sm:$0xff]
        %v1265 = vld [vmem:[%s3 + $0xd0] sm:$0xff]
        %v1266 = vld [vmem:[%s3 + $0xd8] sm:$0xff]
        %v1267 = vld [vmem:[%s3 + $0xe0] sm:$0xff]
        %v1268 = vld [vmem:[%s3 + $0xe8] sm:$0xff]
        %v1269 = vld [vmem:[%s3 + $0xf0] sm:$0xff]
        %v1270 = vld [vmem:[%s3 + $0xf8] sm:$0xff]
        %v1303 = vunpack.c.l.b16 %v1239
        %v1304 = vunpack.c.h.b16 %v1239
        %v1305 = vunpack.c.l.b16 %v1240
        %v1306 = vunpack.c.h.b16 %v1240
        %v1307 = vunpack.c.l.b16 %v1241
        %v1308 = vunpack.c.h.b16 %v1241
        %v1309 = vunpack.c.l.b16 %v1242
        %v1310 = vunpack.c.h.b16 %v1242
        %v1311 = vunpack.c.l.b16 %v1243
        %v1312 = vunpack.c.h.b16 %v1243
        %v1313 = vunpack.c.l.b16 %v1244
        %v1314 = vunpack.c.h.b16 %v1244
        %v1315 = vunpack.c.l.b16 %v1245
        %v1316 = vunpack.c.h.b16 %v1245
        %v1317 = vunpack.c.l.b16 %v1246
        %v1318 = vunpack.c.h.b16 %v1246
        %v1319 = vunpack.c.l.b16 %v1247
        %v1320 = vunpack.c.h.b16 %v1247
        %v1321 = vunpack.c.l.b16 %v1248
        %v1322 = vunpack.c.h.b16 %v1248
        %v1323 = vunpack.c.l.b16 %v1249
        %v1324 = vunpack.c.h.b16 %v1249
        %v1325 = vunpack.c.l.b16 %v1250
        %v1326 = vunpack.c.h.b16 %v1250
        %v1327 = vunpack.c.l.b16 %v1251
        %v1328 = vunpack.c.h.b16 %v1251
        %v1329 = vunpack.c.l.b16 %v1252
        %v1330 = vunpack.c.h.b16 %v1252
        %v1331 = vunpack.c.l.b16 %v1253
        %v1332 = vunpack.c.h.b16 %v1253
        %v1333 = vunpack.c.l.b16 %v1254
        %v1334 = vunpack.c.h.b16 %v1254
        %v1335 = vunpack.c.l.b16 %v1255
        %v1336 = vunpack.c.h.b16 %v1255
        %v1337 = vunpack.c.l.b16 %v1256
        %v1338 = vunpack.c.h.b16 %v1256
        %v1339 = vunpack.c.l.b16 %v1257
        %v1340 = vunpack.c.h.b16 %v1257
        %v1341 = vunpack.c.l.b16 %v1258
        %v1342 = vunpack.c.h.b16 %v1258
        %v1343 = vunpack.c.l.b16 %v1259
        %v1344 = vunpack.c.h.b16 %v1259
        %v1345 = vunpack.c.l.b16 %v1260
        %v1346 = vunpack.c.h.b16 %v1260
        %v1347 = vunpack.c.l.b16 %v1261
        %v1348 = vunpack.c.h.b16 %v1261
        %v1349 = vunpack.c.l.b16 %v1262
        %v1350 = vunpack.c.h.b16 %v1262
        %v1351 = vunpack.c.l.b16 %v1263
        %v1352 = vunpack.c.h.b16 %v1263
        %v1353 = vunpack.c.l.b16 %v1264
        %v1354 = vunpack.c.h.b16 %v1264
        %v1355 = vunpack.c.l.b16 %v1265
        %v1356 = vunpack.c.h.b16 %v1265
        %v1357 = vunpack.c.l.b16 %v1266
        %v1358 = vunpack.c.h.b16 %v1266
        %v1359 = vunpack.c.l.b16 %v1267
        %v1360 = vunpack.c.h.b16 %v1267
        %v1361 = vunpack.c.l.b16 %v1268
        %v1362 = vunpack.c.h.b16 %v1268
        %v1363 = vunpack.c.l.b16 %v1269
        %v1364 = vunpack.c.h.b16 %v1269
        %v1365 = vunpack.c.l.b16 %v1270
        %v1366 = vunpack.c.h.b16 %v1270
        %v1367 = vpack.c.b16 %v1307, %v1303
        %v1368 = vpack.c.b16 %v1308, %v1304
        %v1369 = vpack.c.b16 %v1309, %v1305
        %v1370 = vpack.c.b16 %v1310, %v1306
        %v1371 = vpack.c.b16 %v1315, %v1311
        %v1372 = vpack.c.b16 %v1316, %v1312
        %v1373 = vpack.c.b16 %v1317, %v1313
        %v1374 = vpack.c.b16 %v1318, %v1314
        %v1375 = vpack.c.b16 %v1323, %v1319
        %v1376 = vpack.c.b16 %v1324, %v1320
        %v1377 = vpack.c.b16 %v1325, %v1321
        %v1378 = vpack.c.b16 %v1326, %v1322
        %v1379 = vpack.c.b16 %v1331, %v1327
        %v1380 = vpack.c.b16 %v1332, %v1328
        %v1381 = vpack.c.b16 %v1333, %v1329
        %v1382 = vpack.c.b16 %v1334, %v1330
        %v1383 = vpack.c.b16 %v1339, %v1335
        %v1384 = vpack.c.b16 %v1340, %v1336
        %v1385 = vpack.c.b16 %v1341, %v1337
        %v1386 = vpack.c.b16 %v1342, %v1338
        %v1387 = vpack.c.b16 %v1347, %v1343
        %v1388 = vpack.c.b16 %v1348, %v1344
        %v1389 = vpack.c.b16 %v1349, %v1345
        %v1390 = vpack.c.b16 %v1350, %v1346
        %v1391 = vpack.c.b16 %v1355, %v1351
        %v1392 = vpack.c.b16 %v1356, %v1352
        %v1393 = vpack.c.b16 %v1357, %v1353
        %v1394 = vpack.c.b16 %v1358, %v1354
        %v1395 = vpack.c.b16 %v1363, %v1359
        %v1396 = vpack.c.b16 %v1364, %v1360
        %v1397 = vpack.c.b16 %v1365, %v1361
        %v1398 = vpack.c.b16 %v1366, %v1362
        %1431 = vmatprep.subr.bf16.mxu0 %v1396
        %1432 = vmatpush1.bf16.msra.mxu0 %v1395
        %1433 = vmatprep.subr.bf16.mxu0 %v1392
        %1434 = vmatpush1.bf16.msra.mxu0 %v1391
        %1435 = vmatprep.subr.bf16.mxu0 %v1388
        %1436 = vmatpush1.bf16.msra.mxu0 %v1387
        %1437 = vmatprep.subr.bf16.mxu0 %v1384
        %1438 = vmatpush1.bf16.msra.mxu0 %v1383
        %1439 = vmatprep.subr.bf16.mxu0 %v1380
        %1440 = vmatpush1.bf16.msra.mxu0 %v1379
        %1441 = vmatprep.subr.bf16.mxu0 %v1376
        %1442 = vmatpush1.bf16.msra.mxu0 %v1375
        %1443 = vmatprep.subr.bf16.mxu0 %v1372
        %1444 = vmatpush1.bf16.msra.mxu0 %v1371
        %1445 = vmatprep.subr.bf16.mxu0 %v1368
        %1446 = vmatpush1.bf16.msra.mxu0 %v1367
        %1447 = vmatprep.subr.bf16.mxu0 0
        %1448 = vmatpush2.bf16.msra.mxu0 0
        %1449 = vmatprep.subr.bf16.mxu0 0
        %1450 = vmatpush2.bf16.msra.mxu0 0
        %1451 = vmatprep.subr.bf16.mxu0 0
        %1452 = vmatpush2.bf16.msra.mxu0 0
        %1453 = vmatprep.subr.bf16.mxu0 0
        %1454 = vmatpush2.bf16.msra.mxu0 0
        %1455 = vmatprep.subr.bf16.mxu0 0
        %1456 = vmatpush2.bf16.msra.mxu0 0
        %1457 = vmatprep.subr.bf16.mxu0 0
        %1458 = vmatpush2.bf16.msra.mxu0 0
        %1459 = vmatprep.subr.bf16.mxu0 0
        %1460 = vmatpush2.bf16.msra.mxu0 0
        %1461 = vmatprep.subr.bf16.mxu0 0
        %1462 = vmatpush2.bf16.msra.mxu0 0
        %1463 = vmatprep.mubr.bf16.mxu0 0
        %1464 = vmatmul.mubr.bf16.gmra.mxu0 %v1238
        %v1465 = vpop.f32.mrf.mxu0
        %v1466 = vadd.f32 0.0, %v1465
        %v1467 = vpop.f32.mrf.mxu0
        %v1468 = vadd.f32 0.0, %v1467
        %v1469 = vpop.f32.mrf.mxu0
        %v1470 = vpop.f32.mrf.mxu0
        %1471 = vdwg.mxu0
        %1472 = vmatprep.subr.bf16.mxu0 %v1398
        %1473 = vmatpush1.bf16.msra.mxu0 %v1397
        %1474 = vmatprep.subr.bf16.mxu0 %v1394
        %1475 = vmatpush1.bf16.msra.mxu0 %v1393
        %1476 = vmatprep.subr.bf16.mxu0 %v1390
        %1477 = vmatpush1.bf16.msra.mxu0 %v1389
        %1478 = vmatprep.subr.bf16.mxu0 %v1386
        %1479 = vmatpush1.bf16.msra.mxu0 %v1385
        %1480 = vmatprep.subr.bf16.mxu0 %v1382
        %1481 = vmatpush1.bf16.msra.mxu0 %v1381
        %1482 = vmatprep.subr.bf16.mxu0 %v1378
        %1483 = vmatpush1.bf16.msra.mxu0 %v1377
        %1484 = vmatprep.subr.bf16.mxu0 %v1374
        %1485 = vmatpush1.bf16.msra.mxu0 %v1373
        %1486 = vmatprep.subr.bf16.mxu0 %v1370
        %1487 = vmatpush1.bf16.msra.mxu0 %v1369
        %1488 = vmatprep.subr.bf16.mxu0 0
        %1489 = vmatpush2.bf16.msra.mxu0 0
        %1490 = vmatprep.subr.bf16.mxu0 0
        %1491 = vmatpush2.bf16.msra.mxu0 0
        %1492 = vmatprep.subr.bf16.mxu0 0
        %1493 = vmatpush2.bf16.msra.mxu0 0
        %1494 = vmatprep.subr.bf16.mxu0 0
        %1495 = vmatpush2.bf16.msra.mxu0 0
        %1496 = vmatprep.subr.bf16.mxu0 0
        %1497 = vmatpush2.bf16.msra.mxu0 0
        %1498 = vmatprep.subr.bf16.mxu0 0
        %1499 = vmatpush2.bf16.msra.mxu0 0
        %1500 = vmatprep.subr.bf16.mxu0 0
        %1501 = vmatpush2.bf16.msra.mxu0 0
        %1502 = vmatprep.subr.bf16.mxu0 0
        %1503 = vmatpush2.bf16.msra.mxu0 0
        %1504 = vmatprep.mubr.bf16.mxu0 0
        %1505 = vmatmul.mubr.bf16.gmra.mxu0 %v1238
        %v1506 = vpop.f32.mrf.mxu0
        %v1507 = vadd.f32 0.0, %v1506
        %v1508 = vpop.f32.mrf.mxu0
        %v1509 = vadd.f32 0.0, %v1508
        %v1510 = vpop.f32.mrf.mxu0
        %v1511 = vpop.f32.mrf.mxu0
        %1512 = vdwg.mxu0
        %v1513 = vxor.u32 %v1466, 2147483648
        %v1514 = vxor.u32 %v1468, 2147483648
        %v1515 = vmul.f32 %v1513, 1.442695
        %v1516 = vpow.pop %v1515
        %v1517 = vmul.f32 %v1514, 1.442695
        %v1518 = vpow.pop %v1517
        %v1519 = vadd.f32 %v1516, 1.0
        %v1520 = vadd.f32 %v1518, 1.0
        %v1521 = vrcp.pop %v1519
        %v1522 = vmul.f32 1.0, %v1521
        %v1523 = vrcp.pop %v1520
        %v1524 = vmul.f32 1.0, %v1523
        %v1525 = vmul.f32 %v1466, %v1522
        %v1526 = vmul.f32 %v1468, %v1524
        %v1527 = vmul.f32 %v1525, %v1507
        %v1528 = vmul.f32 %v1526, %v1509
        %v1529 = vpack.c.bf16 %v1527, %v1527
        %v1530 = vpack.c.bf16 %v1528, %v1528
        %v1531 = vld [vmem:[%s4] sm:$0xf]
        %v1532 = vld [vmem:[%s4 + $0x4] sm:$0xf]
        %v1533 = vld [vmem:[%s4 + $0x8] sm:$0xf]
        %v1534 = vld [vmem:[%s4 + $0xc] sm:$0xf]
        %v1535 = vld [vmem:[%s4 + $0x10] sm:$0xf]
        %v1536 = vld [vmem:[%s4 + $0x14] sm:$0xf]
        %v1537 = vld [vmem:[%s4 + $0x18] sm:$0xf]
        %v1538 = vld [vmem:[%s4 + $0x1c] sm:$0xf]
        %v1539 = vld [vmem:[%s4 + $0x20] sm:$0xf]
        %v1540 = vld [vmem:[%s4 + $0x24] sm:$0xf]
        %v1541 = vld [vmem:[%s4 + $0x28] sm:$0xf]
        %v1542 = vld [vmem:[%s4 + $0x2c] sm:$0xf]
        %v1543 = vld [vmem:[%s4 + $0x30] sm:$0xf]
        %v1544 = vld [vmem:[%s4 + $0x34] sm:$0xf]
        %v1545 = vld [vmem:[%s4 + $0x38] sm:$0xf]
        %v1546 = vld [vmem:[%s4 + $0x3c] sm:$0xf]
        %v1547 = vld [vmem:[%s4 + $0x40] sm:$0xf]
        %v1548 = vld [vmem:[%s4 + $0x44] sm:$0xf]
        %v1549 = vld [vmem:[%s4 + $0x48] sm:$0xf]
        %v1550 = vld [vmem:[%s4 + $0x4c] sm:$0xf]
        %v1551 = vld [vmem:[%s4 + $0x50] sm:$0xf]
        %v1552 = vld [vmem:[%s4 + $0x54] sm:$0xf]
        %v1553 = vld [vmem:[%s4 + $0x58] sm:$0xf]
        %v1554 = vld [vmem:[%s4 + $0x5c] sm:$0xf]
        %v1555 = vld [vmem:[%s4 + $0x60] sm:$0xf]
        %v1556 = vld [vmem:[%s4 + $0x64] sm:$0xf]
        %v1557 = vld [vmem:[%s4 + $0x68] sm:$0xf]
        %v1558 = vld [vmem:[%s4 + $0x6c] sm:$0xf]
        %v1559 = vld [vmem:[%s4 + $0x70] sm:$0xf]
        %v1560 = vld [vmem:[%s4 + $0x74] sm:$0xf]
        %v1561 = vld [vmem:[%s4 + $0x78] sm:$0xf]
        %v1562 = vld [vmem:[%s4 + $0x7c] sm:$0xf]
        %v1595 = vunpack.c.l.b16 %v1531
        %v1596 = vunpack.c.l.b16 %v1532
        %v1597 = vunpack.c.l.b16 %v1533
        %v1598 = vunpack.c.l.b16 %v1534
        %v1599 = vunpack.c.l.b16 %v1535
        %v1600 = vunpack.c.l.b16 %v1536
        %v1601 = vunpack.c.l.b16 %v1537
        %v1602 = vunpack.c.l.b16 %v1538
        %v1603 = vunpack.c.l.b16 %v1539
        %v1604 = vunpack.c.l.b16 %v1540
        %v1605 = vunpack.c.l.b16 %v1541
        %v1606 = vunpack.c.l.b16 %v1542
        %v1607 = vunpack.c.l.b16 %v1543
        %v1608 = vunpack.c.l.b16 %v1544
        %v1609 = vunpack.c.l.b16 %v1545
        %v1610 = vunpack.c.l.b16 %v1546
        %v1611 = vunpack.c.l.b16 %v1547
        %v1612 = vunpack.c.l.b16 %v1548
        %v1613 = vunpack.c.l.b16 %v1549
        %v1614 = vunpack.c.l.b16 %v1550
        %v1615 = vunpack.c.l.b16 %v1551
        %v1616 = vunpack.c.l.b16 %v1552
        %v1617 = vunpack.c.l.b16 %v1553
        %v1618 = vunpack.c.l.b16 %v1554
        %v1619 = vunpack.c.l.b16 %v1555
        %v1620 = vunpack.c.l.b16 %v1556
        %v1621 = vunpack.c.l.b16 %v1557
        %v1622 = vunpack.c.l.b16 %v1558
        %v1623 = vunpack.c.l.b16 %v1559
        %v1624 = vunpack.c.l.b16 %v1560
        %v1625 = vunpack.c.l.b16 %v1561
        %v1626 = vunpack.c.l.b16 %v1562
        %v1627 = vpack.c.b16 %v1596, %v1595
        %v1628 = vpack.c.b16 %v1598, %v1597
        %v1629 = vpack.c.b16 %v1600, %v1599
        %v1630 = vpack.c.b16 %v1602, %v1601
        %v1631 = vpack.c.b16 %v1604, %v1603
        %v1632 = vpack.c.b16 %v1606, %v1605
        %v1633 = vpack.c.b16 %v1608, %v1607
        %v1634 = vpack.c.b16 %v1610, %v1609
        %v1635 = vpack.c.b16 %v1612, %v1611
        %v1636 = vpack.c.b16 %v1614, %v1613
        %v1637 = vpack.c.b16 %v1616, %v1615
        %v1638 = vpack.c.b16 %v1618, %v1617
        %v1639 = vpack.c.b16 %v1620, %v1619
        %v1640 = vpack.c.b16 %v1622, %v1621
        %v1641 = vpack.c.b16 %v1624, %v1623
        %v1642 = vpack.c.b16 %v1626, %v1625
        %1659 = vmatprep.subr.bf16.mxu0 0
        %1660 = vmatpush1.bf16.msra.mxu0 %v1634
        %1661 = vmatprep.subr.bf16.mxu0 0
        %1662 = vmatpush1.bf16.msra.mxu0 %v1633
        %1663 = vmatprep.subr.bf16.mxu0 0
        %1664 = vmatpush1.bf16.msra.mxu0 %v1632
        %1665 = vmatprep.subr.bf16.mxu0 0
        %1666 = vmatpush1.bf16.msra.mxu0 %v1631
        %1667 = vmatprep.subr.bf16.mxu0 0
        %1668 = vmatpush1.bf16.msra.mxu0 %v1630
        %1669 = vmatprep.subr.bf16.mxu0 0
        %1670 = vmatpush1.bf16.msra.mxu0 %v1629
        %1671 = vmatprep.subr.bf16.mxu0 0
        %1672 = vmatpush1.bf16.msra.mxu0 %v1628
        %1673 = vmatprep.subr.bf16.mxu0 0
        %1674 = vmatpush1.bf16.msra.mxu0 %v1627
        %1675 = vmatprep.subr.bf16.mxu0 0
        %1676 = vmatpush2.bf16.msra.mxu0 %v1642
        %1677 = vmatprep.subr.bf16.mxu0 0
        %1678 = vmatpush2.bf16.msra.mxu0 %v1641
        %1679 = vmatprep.subr.bf16.mxu0 0
        %1680 = vmatpush2.bf16.msra.mxu0 %v1640
        %1681 = vmatprep.subr.bf16.mxu0 0
        %1682 = vmatpush2.bf16.msra.mxu0 %v1639
        %1683 = vmatprep.subr.bf16.mxu0 0
        %1684 = vmatpush2.bf16.msra.mxu0 %v1638
        %1685 = vmatprep.subr.bf16.mxu0 0
        %1686 = vmatpush2.bf16.msra.mxu0 %v1637
        %1687 = vmatprep.subr.bf16.mxu0 0
        %1688 = vmatpush2.bf16.msra.mxu0 %v1636
        %1689 = vmatprep.subr.bf16.mxu0 0
        %1690 = vmatpush2.bf16.msra.mxu0 %v1635
        %1691 = vmatprep.mubr.bf16.mxu0 %v1530
        %1692 = vmatmul.mubr.bf16.gmra.mxu0 %v1529
        %v1693 = vpop.f32.mrf.mxu0
        %v1694 = vadd.f32 0.0, %v1693
        %v1695 = vpop.f32.mrf.mxu0
        %v1696 = vpop.f32.mrf.mxu0
        %v1697 = vpop.f32.mrf.mxu0
        %1698 = vdwg.mxu0
        %v1699 = vadd.f32 %v1222, %v1694
        %1700 = vst [vmem:[%s323] sm:$0xff] %v1699
        %s1701 = sand.u32 %s225, 1
        %s1702 = scalar_lea.sflag [#allocation4], %s1701
        %s1703 = sand.u32 %s225, 1
        %s1704 = smul.addr %s1703, 8
        %s1705 = scalar_lea.vmem [#allocation3], %s1704
        // Predicated region
        $region57: #{tpu_custom_call.1} parent=55 // pred_check
          %p1706 = pneg %p235
        $region58: #{tpu_custom_call.1} parent=55 // pred_check_branch
          %1708 = sbr.rel (%p1706) target = $region60
        $region59: #{tpu_custom_call.1} parent=55 // pred_region
          %s1710 = ssub.s32 128, 128
          %1711 = vsyncadd %s1702, %s1710
          %s1712 = smul.addr %s23, 128
          %s1713 = scalar_lea.hbm %s9, %s1712
          %s1715 = sshll.u32 %s1705, 4
          %s1716 = int_to_ptr.vmem [resolvable:$true] %s1715
          %1718 = dma.vmem_to_hbm [thread:$0]  %s1716, 128, %s1713, %s1702
        $region60: #{tpu_custom_call.1} parent=55 // pred_fallthru
          _
      $region56: #{tpu_custom_call.1} parent=5 // pred_fallthru
        _
      %p1719 = scmp.le.s32.totalorder 2, %s18
      // Predicated region
      $region61: #{tpu_custom_call.1} parent=5 // pred_check
        %p1720 = pneg %p1719
      $region62: #{tpu_custom_call.1} parent=5 // pred_check_branch
        %1722 = sbr.rel (%p1720) target = $region64
      $region63: #{tpu_custom_call.1} parent=5 // pred_region
        %s1723 = ssub.s32 %s18, 2
        // Predicated region
        $region65: #{tpu_custom_call.1} parent=63 // pred_check
          %p1724 = pneg %p241
        $region66: #{tpu_custom_call.1} parent=63 // pred_check_branch
          %1726 = sbr.rel (%p1724) target = $region68
        $region67: #{tpu_custom_call.1} parent=63 // pred_region
          %s1727 = sand.u32 %s226, 1
          %s1728 = scalar_lea.sflag [#allocation4], %s1727
          %s1729 = sand.u32 %s226, 1
          %s1730 = smul.addr %s1729, 8
          %s1731 = scalar_lea.vmem [#allocation3], %s1730
          %1732 = dma.done %s1728, 128
        $region68: #{tpu_custom_call.1} parent=63 // pred_fallthru
          _
      $region64: #{tpu_custom_call.1} parent=5 // pred_fallthru
        _
    $region6: #{tpu_custom_call.1} parent=1 // loop_footer
      %s22 = sadd.s32 1, %s18
    $region7: #{tpu_custom_call.1} parent=1 // loop_footer_branch
      %17 = sbr.rel target = $region3
    $region8: #{tpu_custom_call.1} parent=1 // loop_exit
      _
    %1733 = vsyncpa [#allocation4], 1
    %s1734 = scalar_lea.sflag [#allocation4], 1
    %1735 = vsyncpa %s1734, 1

</llo_original>
